<compile_context>
chip_gen: v6e
topology: v6e:2x2x1
jax: 0.10.0
libtpu: 0.0.40
codegen_flags: <defaults>
</compile_context>

<pallas_src>
import functools
import math

import jax
import jax.numpy as jnp
import numpy as np
from jax.experimental import pallas as pl
from jax.experimental.pallas import tpu as pltpu

_SQUARINGS = 4                                   # default expm scaling-and-squaring steps
_INV_FACT = tuple(1.0 / math.factorial(k) for k in range(11))   # 1/k!, k=0..10


def _round_up(v, m):
    return (v + m - 1) // m * m


def _cdiv(a, b):
    return -(-a // b)


def _vmem_capacity_bytes():
    """Physical per-core VMEM (128 MiB on v5e/v6e, 64 MiB on v7x)."""
    try:
        cap = getattr(pltpu.get_tpu_info(), "vmem_capacity_bytes", None)
        if cap:
            return int(cap)
    except Exception:
        pass
    return 64 << 20                              # conservative (v7x)


# --------------------------------------------------------------------------
# Feature detection: single-buffered (resident) BlockSpec via pl.Buffered(1).
# --------------------------------------------------------------------------
_SINGLE_BUFFER_OK = None


def _probe_kernel(x_ref, o_ref):
    o_ref[...] = x_ref[...]


def _single_buffer_supported():
    global _SINGLE_BUFFER_OK
    if _SINGLE_BUFFER_OK is None:
        try:
            y = pl.pallas_call(
                _probe_kernel,
                out_shape=jax.ShapeDtypeStruct((8, 128), jnp.float32),
                grid=(2,),
                in_specs=[pl.BlockSpec((8, 128), lambda i: (0, 0),
                                       pipeline_mode=pl.Buffered(1))],
                out_specs=pl.BlockSpec((8, 128), lambda i: (0, 0)),
            )(jnp.zeros((8, 128), jnp.float32))
            jax.block_until_ready(y)
            _SINGLE_BUFFER_OK = True
        except Exception:
            _SINGLE_BUFFER_OK = False
    return _SINGLE_BUFFER_OK


def _resident_spec(block_shape, index_map):
    """Spec for an operand whose block never changes across the grid: single
    buffer it (halves its VMEM footprint) when this jax build supports it."""
    if _single_buffer_supported():
        return pl.BlockSpec(block_shape, index_map, pipeline_mode=pl.Buffered(1))
    return pl.BlockSpec(block_shape, index_map)


# --------------------------------------------------------------------------
# expm of the skew-symmetric projection (whole padded block in VMEM/vregs).
# Scaling-and-squaring with a degree-10 Taylor in Paterson-Stockmeyer form:
# 5 matmuls for the polynomial (chain depth 4) + `squarings` squarings.  The
# 1/k! scales run on the VPU, off the MXU critical path.
# --------------------------------------------------------------------------
def _expm_skew(A, squarings):
    n = A.shape[0]
    row = jax.lax.broadcasted_iota(jnp.int32, (n, n), 0)
    col = jax.lax.broadcasted_iota(jnp.int32, (n, n), 1)
    triu = jnp.where(col > row, A, 0.0)
    skew = triu - triu.T
    eye = jnp.where(row == col, 1.0, 0.0).astype(jnp.float32)

    def dot(a, b):
        return jnp.dot(a, b, preferred_element_type=jnp.float32)

    S = skew * (1.0 / float(1 << squarings))
    c = _INV_FACT
    S2 = dot(S, S)
    S3 = dot(S2, S)
    S4 = dot(S2, S2)
    T0 = c[0] * eye + c[1] * S + c[2] * S2 + c[3] * S3
    T1 = c[4] * eye + c[5] * S + c[6] * S2 + c[7] * S3
    T2 = c[8] * eye + c[9] * S + c[10] * S2
    E = T0 + dot(S4, T1 + dot(S4, T2))           # deg 0-3 + S^4*(4-7) + S^8*(8-10)
    for _ in range(squarings):                   # undo scaling: E <- E @ E
        E = dot(E, E)
    return E


def _retraction_block(A, base_rows, in_pad, out_pad, squarings):
    """B = (base @ expm(skew(A)))[:in_pad, :out_pad].

    `base_rows` is the (in_pad, n) slice of the padded base, or None when
    base == I.  Operands are sliced BEFORE the matmul (both slices are
    128-aligned, i.e. free) so the MXU does in_pad*n*out_pad work instead of
    n^3 and no n x n product is ever materialized.
    """
    E = _expm_skew(A, squarings)
    if base_rows is None:                        # base == I fast path
        return E[:in_pad, :out_pad]
    return jnp.dot(base_rows, E[:, :out_pad], preferred_element_type=jnp.float32)


# --------------------------------------------------------------------------
# Kernels
# --------------------------------------------------------------------------
def _retraction_kernel(*refs, base_is_identity, squarings):
    """Split path, kernel 1: B once, in f32 + a bf16 copy for the apply."""
    if base_is_identity:
        A_ref, bf_ref, bh_ref = refs
        base_rows = None
    else:
        A_ref, base_ref, bf_ref, bh_ref = refs
        base_rows = base_ref[:bf_ref.shape[0], :]
    in_pad, out_pad = bf_ref.shape
    B = _retraction_block(A_ref[...], base_rows, in_pad, out_pad, squarings)
    bf_ref[...] = B
    bh_ref[...] = B.astype(bh_ref.dtype)


def _apply_kernel(x_ref, b_ref, o_ref):
    """Split path, kernel 2: out_tile = x_tile @ B_tile, bf16 in / f32 acc."""
    o_ref[...] = jnp.dot(x_ref[...].astype(b_ref.dtype), b_ref[...],
                         preferred_element_type=jnp.float32)


def _fused_kernel(*refs, base_is_identity, squarings):
    """Fused path: grid step 0 computes B into a persistent VMEM scratch (and
    the B output); every step streams one row-tile of x through the MXU."""
    if base_is_identity:
        A_ref, x_ref, o_ref, bf_ref, b_scr = refs
        base_ref = None
    else:
        A_ref, base_ref, x_ref, o_ref, bf_ref, b_scr = refs

    @pl.when(pl.program_id(0) == 0)
    def _():
        in_pad, out_pad = b_scr.shape
        base_rows = None if base_ref is None else base_ref[:in_pad, :]
        B = _retraction_block(A_ref[...], base_rows, in_pad, out_pad, squarings)
        b_scr[...] = B
        bf_ref[...] = B

    o_ref[...] = jnp.dot(x_ref[...], b_scr[...], preferred_element_type=jnp.float32)


# --------------------------------------------------------------------------
# Wrapper
# --------------------------------------------------------------------------
def _pad_square(mat, n_pad, identity_pad):
    """Zero-pad a square matrix to (n_pad, n_pad); optionally 1s on the pad diag."""
    n = mat.shape[0]
    if n == n_pad:
        return mat
    out = jnp.zeros((n_pad, n_pad), mat.dtype).at[:n, :n].set(mat)
    if identity_pad:
        idx = jnp.arange(n, n_pad)
        out = out.at[idx, idx].set(1.0)
    return out


def _pick_tm(m, tmax):
    """Row tile: multiple of 16, <= tmax, preferring zero padded rows."""
    tmax = max(16, min(tmax, _round_up(m, 16)))
    tmax -= tmax % 16
    if m % 16 == 0:
        floor = max(16, min(tmax, 256))
        t = tmax
        while t >= floor:
            if m % t == 0:
                return t, m                      # exact tiling, no row padding
            t -= 16
    nt = _cdiv(m, tmax)
    t = _round_up(_cdiv(m, nt), 16)
    return t, nt * t


def parametrization_forward(x, A, base, input_size, output_size,
                            base_is_identity=None, fuse=None, tm=None,
                            squarings=None):
    """Forward of `Parametrization` with the orthogonal (expm) retraction.

    x: (..., input_size) -> (out, B) with out: (..., output_size) and
    B = (base @ expm(triu(A,1) - triu(A,1).T))[:input_size, :output_size].
    """
    max_size = max(input_size, output_size)
    n_pad = _round_up(max_size, 128)             # MXU / (8,128)-aligned square
    in_pad = _round_up(input_size, 128)
    out_pad = _round_up(output_size, 128)        # lane-dense output columns
    f32 = jnp.float32

    cap = _vmem_capacity_bytes()
    safe_cap = int(cap * 0.78)                   # ~50 MiB on v7x, ~100 MiB on v5e/v6e
    tm_default = tm if tm is not None else (1024 if cap >= (100 << 20) else 512)

    # base == I is the common expRNN case between rebases: skip `base @ E`.
    if base_is_identity is None:
        try:
            b_np = np.asarray(base)
            base_is_identity = bool(np.array_equal(
                b_np, np.eye(max_size, dtype=b_np.dtype)))
        except Exception:                        # traced value -> assume general base
            base_is_identity = False

    # Norm-dependent squaring count (host side, when A is concrete) keeps the
    # degree-10 Taylor accurate for large ||skew||.
    if squarings is None:
        squarings = _SQUARINGS
        try:
            a_np = np.asarray(A, dtype=np.float32)
            sk = np.triu(a_np, 1)
            sk = sk - sk.T
            nrm = float(np.abs(sk).sum(axis=0).max())        # 1-norm
            if nrm > 0.5:
                squarings = max(_SQUARINGS, int(np.ceil(np.log2(nrm / 0.5))))
        except Exception:
            pass

    # Pad: zeros in A keep the pad block of skew exactly zero (expm -> identity
    # block); base gets an identity pad block so B picks up no garbage.
    A_pad = _pad_square(A.astype(f32), n_pad, identity_pad=False)
    base_pad = (None if base_is_identity
                else _pad_square(base.astype(f32), n_pad, identity_pad=True))

    lead = x.shape[:-1]
    x2 = x.reshape(-1, input_size)
    m = x2.shape[0]

    # VMEM cost models (bytes)
    expm_live = (16 + (0 if base_is_identity else 2)) * n_pad * n_pad * 4
    b_f32 = in_pad * out_pad * 4
    b_bf16 = in_pad * out_pad * 2

    # ---------------------------------------------------------------- fused
    tm_f, m_pad_f = _pick_tm(m, tm_default)
    fused_need = (expm_live + 2 * b_f32
                  + 2 * tm_f * in_pad * 4 + 2 * tm_f * out_pad * 4)
    if fuse is None:
        fuse = (n_pad <= 512) and (fused_need + (2 << 20) <= safe_cap)

    if fuse:
        x_pad = x2.astype(f32)
        if (m_pad_f, in_pad) != (m, input_size):
            x_pad = jnp.pad(x_pad, ((0, m_pad_f - m), (0, in_pad - input_size)))

        in_specs = [_resident_spec((n_pad, n_pad), lambda i: (0, 0))]
        args = [A_pad]
        if not base_is_identity:
            in_specs.append(_resident_spec((n_pad, n_pad), lambda i: (0, 0)))
            args.append(base_pad)
        in_specs.append(pl.BlockSpec((tm_f, in_pad), lambda i: (i, 0)))
        args.append(x_pad)

        out_full, Bf_pad = pl.pallas_call(
            functools.partial(_fused_kernel, base_is_identity=base_is_identity,
                              squarings=squarings),
            out_shape=(jax.ShapeDtypeStruct((m_pad_f, out_pad), f32),
                       jax.ShapeDtypeStruct((in_pad, out_pad), f32)),
            grid=(m_pad_f // tm_f,),
            in_specs=in_specs,
            out_specs=(pl.BlockSpec((tm_f, out_pad), lambda i: (i, 0)),
                       pl.BlockSpec((in_pad, out_pad), lambda i: (0, 0))),
            scratch_shapes=[pltpu.VMEM((in_pad, out_pad), f32)],
            compiler_params=pltpu.CompilerParams(
                # step 0 fills the B scratch that later steps consume -> serial
                dimension_semantics=("arbitrary",),
                vmem_limit_bytes=int(min(max(fused_need + (4 << 20), 16 << 20),
                                         safe_cap)),
            ),
        )(*args)

        out = out_full[:m, :output_size].reshape(*lead, output_size)
        return out, Bf_pad[:input_size, :output_size]

    # ------------------------------------------------- split: retraction (B)
    vmem_full = pl.BlockSpec(memory_space=pltpu.MemorySpace.VMEM)
    retr_need = expm_live + b_f32 + b_bf16
    if retr_need + (2 << 20) <= safe_cap:
        retr_args = [A_pad] if base_is_identity else [A_pad, base_pad]
        Bf_pad, Bh_pad = pl.pallas_call(
            functools.partial(_retraction_kernel,
                              base_is_identity=base_is_identity,
                              squarings=squarings),
            out_shape=(jax.ShapeDtypeStruct((in_pad, out_pad), f32),
                       jax.ShapeDtypeStruct((in_pad, out_pad), jnp.bfloat16)),
            in_specs=[vmem_full] * len(retr_args),
            out_specs=(vmem_full, vmem_full),
            compiler_params=pltpu.CompilerParams(
                vmem_limit_bytes=int(min(max(retr_need + (4 << 20), 16 << 20),
                                         safe_cap))),
        )(*retr_args)
    else:
        # TODO(synk): tile the expm chain (emit_pipeline per matmul, split across
        # both v7x TensorCores) for very large max_size; until then fall back to
        # XLA for the one-time retraction rather than overflowing VMEM.
        triu = jnp.triu(A.astype(f32), k=1)
        skew = triu - triu.T
        E = jax.scipy.linalg.expm(skew)
        Bm = E if base_is_identity else base.astype(f32) @ E
        Bm = Bm[:input_size, :output_size]
        Bf_pad = jnp.zeros((in_pad, out_pad), f32).at[:input_size, :output_size].set(Bm)
        Bh_pad = Bf_pad.astype(jnp.bfloat16)

    # ----------------------------------------------------- split: x @ B apply
    # Output-column tile: keep B as a single resident (single-buffered) block
    # when it fits; otherwise add a grid axis over output columns.
    resident_bufs = 1 if _single_buffer_supported() else 2
    if resident_bufs * b_bf16 <= safe_cap // 3:
        tn = out_pad
        b_bufs = resident_bufs
        b_spec = _resident_spec((in_pad, tn), lambda j, i: (0, j))
    else:
        blocks = out_pad // 128
        f = blocks
        while f > 1 and (blocks % f or 2 * in_pad * f * 128 * 2 > safe_cap // 3):
            f -= 1
        tn = f * 128
        b_bufs = 2
        b_spec = pl.BlockSpec((in_pad, tn), lambda j, i: (0, j))
    n_blocks = out_pad // tn

    # Row tile from the remaining VMEM budget (chip-aware default on top).
    rem = safe_cap - b_bufs * in_pad * tn * 2 - (4 << 20)
    row_bytes = 2 * in_pad * 4 + 2 * tn * 4      # double-buffered x (<=f32) + f32 out
    tm_cap = max(16, (rem // row_bytes) // 16 * 16)
    tm_sel, m_pad = _pick_tm(m, min(tm_default, tm_cap))

    # Only re-materialize (pad) x when its shape needs it; fold the bf16 cast
    # into that same pass.  Otherwise stream x as-is and cast in-register.
    if (m_pad, in_pad) != (m, input_size):
        x_in = jnp.pad(x2.astype(jnp.bfloat16),
                       ((0, m_pad - m), (0, in_pad - input_size)))
    else:
        x_in = x2 if x2.dtype in (jnp.float32, jnp.bfloat16) else x2.astype(f32)
    x_itemsize = jnp.dtype(x_in.dtype).itemsize

    apply_need = (b_bufs * in_pad * tn * 2
                  + 2 * tm_sel * in_pad * x_itemsize + 2 * tm_sel * tn * 4)
    vmem_limit = int(min(max(apply_need + (4 << 20), 16 << 20), safe_cap))
    vmem_limit = max(vmem_limit, apply_need + (1 << 20))     # never below the need

    out_full = pl.pallas_call(
        _apply_kernel,
        out_shape=jax.ShapeDtypeStruct((m_pad, out_pad), f32),
        grid=(n_blocks, m_pad // tm_sel),        # m innermost: B block stays put
        in_specs=[pl.BlockSpec((tm_sel, in_pad), lambda j, i: (i, 0)), b_spec],
        out_specs=pl.BlockSpec((tm_sel, tn), lambda j, i: (i, j)),
        compiler_params=pltpu.CompilerParams(
            dimension_semantics=("parallel", "parallel"),
            vmem_limit_bytes=vmem_limit,
        ),
    )(x_in, Bh_pad)

    out = out_full[:m, :output_size].reshape(*lead, output_size)
    return out, Bf_pad[:input_size, :output_size]


# --------------------------------------------------------------------------
# Pure-JAX reference
# --------------------------------------------------------------------------
def _reference_forward(x, A, base, input_size, output_size):
    triu = jnp.triu(A, k=1)
    skew = triu - triu.T
    E = jax.scipy.linalg.expm(skew)
    B = (base @ E)[:input_size, :output_size]
    return x @ B, B


if __name__ == "__main__":
    input_size = 32
    output_size = 16
    max_size = max(input_size, output_size)

    key = jax.random.PRNGKey(0)
    k_a, k_x, k_b = jax.random.split(key, 3)

    # deterministic "initializer" for the raw parameter _A (small uniform)
    A = jax.random.uniform(
        k_a, (max_size, max_size), dtype=jnp.float32, minval=-0.2, maxval=0.2
    )
    base = jnp.eye(max_size, dtype=jnp.float32)           # self.base buffer
    x = jax.random.normal(k_x, (2, 8, input_size), dtype=jnp.float32)

    # 1) common case (base == I): fused single-kernel path + identity fast path
    out, B = parametrization_forward(x, A, base, input_size, output_size)
    out = jax.block_until_ready(out)
    B = jax.block_until_ready(B)
    out_ref, B_ref = _reference_forward(x, A, base, input_size, output_size)
    assert out.shape == (2, 8, output_size)
    assert B.shape == (input_size, output_size)
    np.testing.assert_allclose(np.asarray(B), np.asarray(B_ref), rtol=1e-2, atol=1e-2)
    np.testing.assert_allclose(np.asarray(out), np.asarray(out_ref), rtol=1e-2, atol=1e-2)

    # 2) general base (post-rebase case): split retraction + bf16 apply path
    base2 = base + 0.1 * jax.random.normal(k_b, (max_size, max_size), dtype=jnp.float32)
    out2, B2 = parametrization_forward(x, A, base2, input_size, output_size, fuse=False)
    out2 = jax.block_until_ready(out2)
    B2 = jax.block_until_ready(B2)
    out2_ref, B2_ref = _reference_forward(x, A, base2, input_size, output_size)
    np.testing.assert_allclose(np.asarray(B2), np.asarray(B2_ref), rtol=1e-2, atol=1e-2)
    # apply matmul runs in bf16 on this path -> slightly looser tolerance
    np.testing.assert_allclose(np.asarray(out2), np.asarray(out2_ref), rtol=2e-2, atol=2e-2)

    print("KERNEL_OK")
</pallas_src>

<mosaic_0001>
module attributes {stable_mosaic.version = 11 : i64} {
  func.func @_probe_kernel(%arg0: i32, %arg1: memref<8x128xf32, #tpu.memory_space<vmem>>, %arg2: memref<8x128xf32, #tpu.memory_space<vmem>>) attributes {dimension_semantics = [#tpu.dimension_semantics<arbitrary>], iteration_bounds = array<i64: 2>, scalar_prefetch = 0 : i64, scratch_operands = 0 : i64, tpu.core_type = #tpu.core_type<tc>, window_params = [{pipeline_mode = #tpu.pipeline_mode<synchronous>, transform_indices = @transform_0, window_bounds = array<i64: 8, 128>}, {pipeline_mode = #tpu.pipeline_mode<synchronous>, transform_indices = @transform_1, window_bounds = array<i64: 8, 128>}]} {
    %c0 = arith.constant 0 : index
    %c0_0 = arith.constant 0 : index
    %0 = vector.load %arg1[%c0, %c0_0] : memref<8x128xf32, #tpu.memory_space<vmem>>, vector<8x128xf32>
    %c0_1 = arith.constant 0 : index
    %c0_2 = arith.constant 0 : index
    %1 = vector.load %arg2[%c0_1, %c0_2] : memref<8x128xf32, #tpu.memory_space<vmem>>, vector<8x128xf32>
    tpu.vector_store %arg2[%c0_1, %c0_2], %0 {strides = array<i32>} : memref<8x128xf32, #tpu.memory_space<vmem>>, vector<8x128xf32>,
    return
  }
  func.func @transform_0(%arg0: i32) -> (i32, i32) {
    %c0_i32 = arith.constant 0 : i32
    %c0_i32_0 = arith.constant 0 : i32
    %c0_i32_1 = arith.constant 0 : i32
    return %c0_i32, %c0_i32_0 : i32, i32
  }
  func.func @transform_1(%arg0: i32) -> (i32, i32) {
    %c0_i32 = arith.constant 0 : i32
    %c0_i32_0 = arith.constant 0 : i32
    %c0_i32_1 = arith.constant 0 : i32
    return %c0_i32, %c0_i32_0 : i32, i32
  }
}

module attributes {stable_mosaic.version = 11 : i64} {
  func.func @_fused_kernel(%arg0: i32, %arg1: memref<128x128xf32, #tpu.memory_space<vmem>>, %arg2: memref<16x128xf32, #tpu.memory_space<vmem>>, %arg3: memref<16x128xf32, #tpu.memory_space<vmem>>, %arg4: memref<128x128xf32, #tpu.memory_space<vmem>>, %arg5: memref<128x128xf32, #tpu.memory_space<vmem>>) attributes {dimension_semantics = [#tpu.dimension_semantics<arbitrary>], iteration_bounds = array<i64: 1>, scalar_prefetch = 0 : i64, scratch_operands = 1 : i64, tpu.core_type = #tpu.core_type<tc>, window_params = [{pipeline_mode = #tpu.pipeline_mode<synchronous>, transform_indices = @transform_0, window_bounds = array<i64: 128, 128>}, {transform_indices = @transform_1, window_bounds = array<i64: 16, 128>}, {transform_indices = @transform_2, window_bounds = array<i64: 16, 128>}, {pipeline_mode = #tpu.pipeline_mode<synchronous>, transform_indices = @transform_3, window_bounds = array<i64: 128, 128>}]} {
    %c0_i32 = arith.constant 0 : i32
    %0 = arith.cmpi eq, %arg0, %c0_i32 : i32
    %1 = arith.extui %0 : i1 to i32
    %c0_i32_0 = arith.constant 0 : i32
    %2 = arith.cmpi ne, %1, %c0_i32_0 : i32
    scf.if %2 {
      %c0_6 = arith.constant 0 : index
      %c0_7 = arith.constant 0 : index
      %7 = vector.load %arg1[%c0_6, %c0_7] : memref<128x128xf32, #tpu.memory_space<vmem>>, vector<128x128xf32>
      %8 = tpu.iota {dimensions = array<i32: 0>} : vector<128x128xi32>
      %9 = tpu.iota {dimensions = array<i32: 1>} : vector<128x128xi32>
      %10 = arith.cmpi sgt, %9, %8 : vector<128x128xi32>
      %cst_8 = arith.constant 0.000000e+00 : f32
      %11 = vector.broadcast %cst_8 : f32 to vector<128x128xf32>
      %12 = arith.select %10, %7, %11 : vector<128x128xi1>, vector<128x128xf32>
      %13 = tpu.transpose %12, [1, 0] : vector<128x128xf32> -> vector<128x128xf32>
      %14 = arith.subf %12, %13 : vector<128x128xf32>
      %15 = arith.cmpi eq, %8, %9 : vector<128x128xi32>
      %cst_9 = arith.constant 1.000000e+00 : f32
      %cst_10 = arith.constant 0.000000e+00 : f32
      %16 = vector.broadcast %cst_9 : f32 to vector<128x128xf32>
      %17 = vector.broadcast %cst_10 : f32 to vector<128x128xf32>
      %18 = arith.select %15, %16, %17 : vector<128x128xi1>, vector<128x128xf32>
      %cst_11 = arith.constant 6.250000e-02 : f32
      %19 = vector.broadcast %cst_11 : f32 to vector<128x128xf32>
      %20 = arith.mulf %14, %19 : vector<128x128xf32>
      %cst_12 = arith.constant dense<0.000000e+00> : vector<128x128xf32>
      %21 = tpu.matmul %20, %20, %cst_12 {dimension_numbers = #tpu.dot_dimension_numbers<[1], [0], [0], [1], [0, 0, 1, 1], [], []>} : vector<128x128xf32>, vector<128x128xf32>, vector<128x128xf32> -> vector<128x128xf32>
      %cst_13 = arith.constant dense<0.000000e+00> : vector<128x128xf32>
      %22 = tpu.matmul %21, %20, %cst_13 {dimension_numbers = #tpu.dot_dimension_numbers<[1], [0], [0], [1], [0, 0, 1, 1], [], []>} : vector<128x128xf32>, vector<128x128xf32>, vector<128x128xf32> -> vector<128x128xf32>
      %cst_14 = arith.constant dense<0.000000e+00> : vector<128x128xf32>
      %23 = tpu.matmul %21, %21, %cst_14 {dimension_numbers = #tpu.dot_dimension_numbers<[1], [0], [0], [1], [0, 0, 1, 1], [], []>} : vector<128x128xf32>, vector<128x128xf32>, vector<128x128xf32> -> vector<128x128xf32>
      %cst_15 = arith.constant 1.000000e+00 : f32
      %24 = vector.broadcast %cst_15 : f32 to vector<128x128xf32>
      %25 = arith.mulf %24, %18 : vector<128x128xf32>
      %cst_16 = arith.constant 1.000000e+00 : f32
      %26 = vector.broadcast %cst_16 : f32 to vector<128x128xf32>
      %27 = arith.mulf %26, %20 : vector<128x128xf32>
      %28 = arith.addf %25, %27 : vector<128x128xf32>
      %cst_17 = arith.constant 5.000000e-01 : f32
      %29 = vector.broadcast %cst_17 : f32 to vector<128x128xf32>
      %30 = arith.mulf %29, %21 : vector<128x128xf32>
      %31 = arith.addf %28, %30 : vector<128x128xf32>
      %cst_18 = arith.constant 0.166666672 : f32
      %32 = vector.broadcast %cst_18 : f32 to vector<128x128xf32>
      %33 = arith.mulf %32, %22 : vector<128x128xf32>
      %34 = arith.addf %31, %33 : vector<128x128xf32>
      %cst_19 = arith.constant 0.0416666679 : f32
      %35 = vector.broadcast %cst_19 : f32 to vector<128x128xf32>
      %36 = arith.mulf %35, %18 : vector<128x128xf32>
      %cst_20 = arith.constant 0.00833333377 : f32
      %37 = vector.broadcast %cst_20 : f32 to vector<128x128xf32>
      %38 = arith.mulf %37, %20 : vector<128x128xf32>
      %39 = arith.addf %36, %38 : vector<128x128xf32>
      %cst_21 = arith.constant 0.00138888892 : f32
      %40 = vector.broadcast %cst_21 : f32 to vector<128x128xf32>
      %41 = arith.mulf %40, %21 : vector<128x128xf32>
      %42 = arith.addf %39, %41 : vector<128x128xf32>
      %cst_22 = arith.constant 1.98412701E-4 : f32
      %43 = vector.broadcast %cst_22 : f32 to vector<128x128xf32>
      %44 = arith.mulf %43, %22 : vector<128x128xf32>
      %45 = arith.addf %42, %44 : vector<128x128xf32>
      %cst_23 = arith.constant 2.48015876E-5 : f32
      %46 = vector.broadcast %cst_23 : f32 to vector<128x128xf32>
      %47 = arith.mulf %46, %18 : vector<128x128xf32>
      %cst_24 = arith.constant 2.75573188E-6 : f32
      %48 = vector.broadcast %cst_24 : f32 to vector<128x128xf32>
      %49 = arith.mulf %48, %20 : vector<128x128xf32>
      %50 = arith.addf %47, %49 : vector<128x128xf32>
      %cst_25 = arith.constant 2.755732E-7 : f32
      %51 = vector.broadcast %cst_25 : f32 to vector<128x128xf32>
      %52 = arith.mulf %51, %21 : vector<128x128xf32>
      %53 = arith.addf %50, %52 : vector<128x128xf32>
      %cst_26 = arith.constant dense<0.000000e+00> : vector<128x128xf32>
      %54 = tpu.matmul %23, %53, %cst_26 {dimension_numbers = #tpu.dot_dimension_numbers<[1], [0], [0], [1], [0, 0, 1, 1], [], []>} : vector<128x128xf32>, vector<128x128xf32>, vector<128x128xf32> -> vector<128x128xf32>
      %55 = arith.addf %45, %54 : vector<128x128xf32>
      %cst_27 = arith.constant dense<0.000000e+00> : vector<128x128xf32>
      %56 = tpu.matmul %23, %55, %cst_27 {dimension_numbers = #tpu.dot_dimension_numbers<[1], [0], [0], [1], [0, 0, 1, 1], [], []>} : vector<128x128xf32>, vector<128x128xf32>, vector<128x128xf32> -> vector<128x128xf32>
      %57 = arith.addf %34, %56 : vector<128x128xf32>
      %cst_28 = arith.constant dense<0.000000e+00> : vector<128x128xf32>
      %58 = tpu.matmul %57, %57, %cst_28 {dimension_numbers = #tpu.dot_dimension_numbers<[1], [0], [0], [1], [0, 0, 1, 1], [], []>} : vector<128x128xf32>, vector<128x128xf32>, vector<128x128xf32> -> vector<128x128xf32>
      %cst_29 = arith.constant dense<0.000000e+00> : vector<128x128xf32>
      %59 = tpu.matmul %58, %58, %cst_29 {dimension_numbers = #tpu.dot_dimension_numbers<[1], [0], [0], [1], [0, 0, 1, 1], [], []>} : vector<128x128xf32>, vector<128x128xf32>, vector<128x128xf32> -> vector<128x128xf32>
      %cst_30 = arith.constant dense<0.000000e+00> : vector<128x128xf32>
      %60 = tpu.matmul %59, %59, %cst_30 {dimension_numbers = #tpu.dot_dimension_numbers<[1], [0], [0], [1], [0, 0, 1, 1], [], []>} : vector<128x128xf32>, vector<128x128xf32>, vector<128x128xf32> -> vector<128x128xf32>
      %cst_31 = arith.constant dense<0.000000e+00> : vector<128x128xf32>
      %61 = tpu.matmul %60, %60, %cst_31 {dimension_numbers = #tpu.dot_dimension_numbers<[1], [0], [0], [1], [0, 0, 1, 1], [], []>} : vector<128x128xf32>, vector<128x128xf32>, vector<128x128xf32> -> vector<128x128xf32>
      %c0_32 = arith.constant 0 : index
      %c0_33 = arith.constant 0 : index
      %62 = vector.load %arg5[%c0_32, %c0_33] : memref<128x128xf32, #tpu.memory_space<vmem>>, vector<128x128xf32>
      tpu.vector_store %arg5[%c0_32, %c0_33], %61 {strides = array<i32>} : memref<128x128xf32, #tpu.memory_space<vmem>>, vector<128x128xf32>,
      %c0_34 = arith.constant 0 : index
      %c0_35 = arith.constant 0 : index
      %63 = vector.load %arg4[%c0_34, %c0_35] : memref<128x128xf32, #tpu.memory_space<vmem>>, vector<128x128xf32>
      tpu.vector_store %arg4[%c0_34, %c0_35], %61 {strides = array<i32>} : memref<128x128xf32, #tpu.memory_space<vmem>>, vector<128x128xf32>,
    } else {
    }
    %c0 = arith.constant 0 : index
    %c0_1 = arith.constant 0 : index
    %3 = vector.load %arg2[%c0, %c0_1] : memref<16x128xf32, #tpu.memory_space<vmem>>, vector<16x128xf32>
    %c0_2 = arith.constant 0 : index
    %c0_3 = arith.constant 0 : index
    %4 = vector.load %arg5[%c0_2, %c0_3] : memref<128x128xf32, #tpu.memory_space<vmem>>, vector<128x128xf32>
    %cst = arith.constant dense<0.000000e+00> : vector<16x128xf32>
    %5 = tpu.matmul %3, %4, %cst {dimension_numbers = #tpu.dot_dimension_numbers<[1], [0], [0], [1], [0, 0, 1, 1], [], []>} : vector<16x128xf32>, vector<128x128xf32>, vector<16x128xf32> -> vector<16x128xf32>
    %c0_4 = arith.constant 0 : index
    %c0_5 = arith.constant 0 : index
    %6 = vector.load %arg3[%c0_4, %c0_5] : memref<16x128xf32, #tpu.memory_space<vmem>>, vector<16x128xf32>
    tpu.vector_store %arg3[%c0_4, %c0_5], %5 {strides = array<i32>} : memref<16x128xf32, #tpu.memory_space<vmem>>, vector<16x128xf32>,
    return
  }
  func.func @transform_0(%arg0: i32) -> (i32, i32) {
    %c0_i32 = arith.constant 0 : i32
    %c0_i32_0 = arith.constant 0 : i32
    %c0_i32_1 = arith.constant 0 : i32
    return %c0_i32, %c0_i32_0 : i32, i32
  }
  func.func @transform_1(%arg0: i32) -> (i32, i32) {
    %c0_i32 = arith.constant 0 : i32
    %c0_i32_0 = arith.constant 0 : i32
    return %arg0, %c0_i32 : i32, i32
  }
  func.func @transform_2(%arg0: i32) -> (i32, i32) {
    %c0_i32 = arith.constant 0 : i32
    %c0_i32_0 = arith.constant 0 : i32
    return %arg0, %c0_i32 : i32, i32
  }
  func.func @transform_3(%arg0: i32) -> (i32, i32) {
    %c0_i32 = arith.constant 0 : i32
    %c0_i32_0 = arith.constant 0 : i32
    %c0_i32_1 = arith.constant 0 : i32
    return %c0_i32, %c0_i32_0 : i32, i32
  }
}

</mosaic_0001>

<llo_original>
// kernel: tpu_custom_call.1
$region0: #{tpu_custom_call.1}
  #allocation0 [shape = 'u32[]', space=smem, size = 0x4, offset = 0x4, fixed_abs, tag = 'smem constant byte address 0x4 - core index']
  #allocation1 [shape = 'u32[144,128]{1,0:T(1,128)}', space=vmem, size = 0x12000, scoped, tag = 'internal scratch']
  %s0 = inlined_call_operand.hbm [shape: f32[8,128], index: 0, kind: input, shape index: {}]
  %s1 = inlined_call_operand.hbm [shape: f32[8,128], index: 1, kind: output, shape index: {}]
  %s2 = sld [smem:[#allocation0]]
  $region41: #{tpu_custom_call.1} parent=0
    _
  %s4 = ssub.s32 1, %s2
  %s5 = scalar_select 0, %s4, %s2
  $region1: #{tpu_custom_call.1} parent=0
    #allocation2 [shape = 'u8[4096]{0}', space=vmem, size = 0x1000, scoped, tag = 'input window, operand 0, single buffered']
    #allocation3 [shape = 's32[2]{0}', space=sflag, size = 0x8, scoped, tag = 'scoped memory for tpu_custom_call.1']
    #allocation4 [shape = 's32[2]{0}', space=sflag, size = 0x8, scoped, tag = 'scoped memory for tpu_custom_call.1']
    #allocation5 [shape = 'u8[4096]{0}', space=vmem, size = 0x1000, scoped, tag = 'output window, operand 0, single buffered']
    %6 = vsyncpa [#allocation3], 0
    %7 = vsyncpa [#allocation4], 0
    loop: start=0, step=1, limit=4
    $region2: #{tpu_custom_call.1} parent=1 // loop_pre_header
      _
    $region3: #{tpu_custom_call.1} parent=1 // loop_header
      %s9 = sphi 0, %s13
      %p10 = scmp.ge.s32.totalorder %s9, 4
      %s17 = sphi 0, %s17
      %s19 = sphi 0, %s17
      %s20 = sphi 0, %s19
      %s34 = sphi 0, %s20
      %s38 = sphi 0, %s38
      %s40 = sphi 0, %s38
      %s41 = sphi 0, %s40
      %s55 = sphi 0, %s41
    $region4: #{tpu_custom_call.1} parent=1 // loop_header_branch
      %12 = sbr.rel (%p10) target = $region8
    $region5: #{tpu_custom_call.1} parent=1 // loop_body
      %s14 = ssub.s32 %s9, 1
      %s15 = ssub.s32 %s9, 2
      %s16 = sadd.s32 %s9, 1
      %s18 = sadd.s32 %s17, 1
      %p21 = scmp.eq.s32.totalorder %s9, 1
      %p22 = scmp.ne.s32.totalorder %s17, %s19
      %p23 = scmp.eq.s32.totalorder %s9, 0
      %p24 = por %p22, %p23
      %p25 = scmp.ne.s32.totalorder %s17, %s19
      %p26 = scmp.eq.s32.totalorder %s14, 1
      %p27 = por %p25, %p26
      %p28 = scmp.ne.s32.totalorder %s19, %s20
      %p29 = scmp.eq.s32.totalorder %s14, 0
      %p30 = por %p28, %p29
      %p31 = scmp.ne.s32.totalorder %s19, %s20
      %p32 = scmp.eq.s32.totalorder %s15, 1
      %p33 = por %p31, %p32
      %p35 = scmp.ne.s32.totalorder %s20, %s34
      %p36 = scmp.eq.s32.totalorder %s15, 0
      %p37 = por %p35, %p36
      %s39 = sadd.s32 %s38, 1
      %p42 = scmp.eq.s32.totalorder %s9, 1
      %p43 = scmp.ne.s32.totalorder %s38, %s40
      %p44 = scmp.eq.s32.totalorder %s9, 0
      %p45 = por %p43, %p44
      %p46 = scmp.ne.s32.totalorder %s38, %s40
      %p47 = scmp.eq.s32.totalorder %s14, 1
      %p48 = por %p46, %p47
      %p49 = scmp.ne.s32.totalorder %s40, %s41
      %p50 = scmp.eq.s32.totalorder %s14, 0
      %p51 = por %p49, %p50
      %p52 = scmp.ne.s32.totalorder %s40, %s41
      %p53 = scmp.eq.s32.totalorder %s15, 1
      %p54 = por %p52, %p53
      %p56 = scmp.ne.s32.totalorder %s41, %s55
      %p57 = scmp.eq.s32.totalorder %s15, 0
      %p58 = por %p56, %p57
      %p59 = scmp.le.s32.totalorder 1, %s9
      %p60 = scmp.lt.s32.totalorder %s9, 3
      %p61 = pnand %p59, %p60
      %p62 = pneg %p61
      // Predicated region
      $region9: #{tpu_custom_call.1} parent=5 // pred_check
        _
      $region10: #{tpu_custom_call.1} parent=5 // pred_check_branch
        %64 = sbr.rel (%p61) target = $region12
      $region11: #{tpu_custom_call.1} parent=5 // pred_region
        %s65 = ssub.s32 %s9, 1
        // Predicated region
        $region13: #{tpu_custom_call.1} parent=11 // pred_check
          %p66 = pneg %p30
        $region14: #{tpu_custom_call.1} parent=11 // pred_check_branch
          %68 = sbr.rel (%p66) target = $region16
        $region15: #{tpu_custom_call.1} parent=11 // pred_region
          %s70 = ssub.s32 128, 128
          %71 = vsyncadd [#allocation3], %s70
          %s73 = sshll.u32 [#allocation2], 4
          %s74 = int_to_ptr.vmem [resolvable:$true] %s73
          %76 = dma.hbm_to_vmem [thread:$0]  %s0, 128, %s74, [#allocation3]
        $region16: #{tpu_custom_call.1} parent=11 // pred_fallthru
          _
      $region12: #{tpu_custom_call.1} parent=5 // pred_fallthru
        _
      %p77 = scmp.lt.s32.totalorder %s9, 2
      // Predicated region
      $region17: #{tpu_custom_call.1} parent=5 // pred_check
        %p78 = pneg %p77
      $region18: #{tpu_custom_call.1} parent=5 // pred_check_branch
        %80 = sbr.rel (%p78) target = $region20
      $region19: #{tpu_custom_call.1} parent=5 // pred_region
        _
      $region20: #{tpu_custom_call.1} parent=5 // pred_fallthru
        _
      %p81 = scmp.le.s32.totalorder 1, %s9
      %p82 = scmp.lt.s32.totalorder %s9, 3
      %p83 = pnand %p81, %p82
      %p84 = pneg %p83
      // Predicated region
      $region21: #{tpu_custom_call.1} parent=5 // pred_check
        _
      $region22: #{tpu_custom_call.1} parent=5 // pred_check_branch
        %86 = sbr.rel (%p83) target = $region24
      $region23: #{tpu_custom_call.1} parent=5 // pred_region
        %s87 = ssub.s32 %s9, 1
        // Predicated region
        $region25: #{tpu_custom_call.1} parent=23 // pred_check
          %p88 = pneg %p30
        $region26: #{tpu_custom_call.1} parent=23 // pred_check_branch
          %90 = sbr.rel (%p88) target = $region28
        $region27: #{tpu_custom_call.1} parent=23 // pred_region
          %91 = dma.done [#allocation3], 128
        $region28: #{tpu_custom_call.1} parent=23 // pred_fallthru
          _
        %p92 = pneg %p30
        %p93 = pneg %p27
        %p94 = pneg %p51
        %p95 = pneg %p48
        %v96 = vld [vmem:[#allocation2] sm:$0xff]
        %97 = vst [vmem:[#allocation5] sm:$0xff] %v96
        // Predicated region
        $region29: #{tpu_custom_call.1} parent=23 // pred_check
          %p98 = pneg %p48
        $region30: #{tpu_custom_call.1} parent=23 // pred_check_branch
          %100 = sbr.rel (%p98) target = $region32
        $region31: #{tpu_custom_call.1} parent=23 // pred_region
          %s102 = ssub.s32 128, 128
          %103 = vsyncadd [#allocation4], %s102
          %s105 = sshll.u32 [#allocation5], 4
          %s106 = int_to_ptr.vmem [resolvable:$true] %s105
          %108 = dma.vmem_to_hbm [thread:$0]  %s106, 128, %s1, [#allocation4]
        $region32: #{tpu_custom_call.1} parent=23 // pred_fallthru
          _
        // Predicated region
        $region33: #{tpu_custom_call.1} parent=23 // pred_check
          %p109 = pneg %p48
        $region34: #{tpu_custom_call.1} parent=23 // pred_check_branch
          %111 = sbr.rel (%p109) target = $region36
        $region35: #{tpu_custom_call.1} parent=23 // pred_region
          %112 = dma.done [#allocation4], 128
        $region36: #{tpu_custom_call.1} parent=23 // pred_fallthru
          _
      $region24: #{tpu_custom_call.1} parent=5 // pred_fallthru
        _
      %p113 = scmp.le.s32.totalorder 2, %s9
      // Predicated region
      $region37: #{tpu_custom_call.1} parent=5 // pred_check
        %p114 = pneg %p113
      $region38: #{tpu_custom_call.1} parent=5 // pred_check_branch
        %116 = sbr.rel (%p114) target = $region40
      $region39: #{tpu_custom_call.1} parent=5 // pred_region
        %s117 = ssub.s32 %s9, 2
      $region40: #{tpu_custom_call.1} parent=5 // pred_fallthru
        _
    $region6: #{tpu_custom_call.1} parent=1 // loop_footer
      %s13 = sadd.s32 1, %s9
    $region7: #{tpu_custom_call.1} parent=1 // loop_footer_branch
      %8 = sbr.rel target = $region3
    $region8: #{tpu_custom_call.1} parent=1 // loop_exit
      _
    %118 = vsyncpa [#allocation3], 1
    %s119 = scalar_lea.sflag [#allocation3], 1
    %120 = vsyncpa %s119, 1
    %121 = vsyncpa [#allocation4], 1
    %s122 = scalar_lea.sflag [#allocation4], 1
    %123 = vsyncpa %s122, 1

// kernel: tpu_custom_call.1
$region0: #{tpu_custom_call.1}
  #allocation0 [shape = 'u32[]', space=smem, size = 0x4, offset = 0x4, fixed_abs, tag = 'smem constant byte address 0x4 - core index']
  #allocation1 [shape = 'u32[144,128]{1,0:T(1,128)}', space=vmem, size = 0x12000, scoped, tag = 'internal scratch']
  #allocation2 [shape = 'f32[128,128]{1,0:T(8,128)}', space=vmem, size = 0x10000, scoped, tag = 'scratch operand']
  %s0 = inlined_call_operand.hbm [shape: f32[128,128], index: 0, kind: input, shape index: {}]
  %s1 = inlined_call_operand.hbm [shape: f32[16,128], index: 1, kind: input, shape index: {}]
  %s2 = inlined_call_operand.hbm [shape: f32[16,128], index: 2, kind: output, shape index: {0}]
  %s3 = inlined_call_operand.hbm [shape: f32[128,128], index: 3, kind: output, shape index: {1}]
  %4 = xla_tuple %s2, %s3
  %s5 = sld [smem:[#allocation0]]
  $region38: #{tpu_custom_call.1} parent=0
    _
  %s7 = ssub.s32 1, %s5
  %s8 = scalar_select 0, %s7, %s5
  $region1: #{tpu_custom_call.1} parent=0
    #allocation3 [shape = 'u8[65536]{0}', space=vmem, size = 0x10000, scoped, tag = 'input window, operand 0, single buffered']
    #allocation4 [shape = 's32[1]{0}', space=sflag, size = 0x4, scoped, tag = 'scoped memory for tpu_custom_call.1']
    #allocation5 [shape = 's32[1]{0}', space=sflag, size = 0x4, scoped, tag = 'scoped memory for tpu_custom_call.1']
    #allocation6 [shape = 'u8[8192]{0}', space=vmem, size = 0x2000, scoped, tag = 'input window, operand 1, single buffered']
    #allocation7 [shape = 's32[1]{0}', space=sflag, size = 0x4, scoped, tag = 'scoped memory for tpu_custom_call.1']
    #allocation8 [shape = 'u8[8192]{0}', space=vmem, size = 0x2000, scoped, tag = 'output window, operand 0, single buffered']
    #allocation9 [shape = 'u8[65536]{0}', space=vmem, size = 0x10000, scoped, tag = 'output window, operand 1, single buffered']
    #allocation10 [shape = 's32[1]{0}', space=sflag, size = 0x4, scoped, tag = 'scoped memory for tpu_custom_call.1']
    %9 = vsyncpa [#allocation4], 0
    %10 = vsyncpa [#allocation7], 0
    %11 = vsyncpa [#allocation5], 0
    %12 = vsyncpa [#allocation10], 0
    // Predicated region
    $region2: #{tpu_custom_call.1} parent=1 // pred_check
      _
    $region3: #{tpu_custom_call.1} parent=1 // pred_check_branch
      %14 = sbr.rel (0) target = $region5
    $region4: #{tpu_custom_call.1} parent=1 // pred_region
      %s16 = ssub.s32 2048, 2048
      %17 = vsyncadd [#allocation4], %s16
      %s18 = sshll.u32 [#allocation3], 4
      %s19 = int_to_ptr.vmem [resolvable:$true] %s18
      %24 = dma.hbm_to_vmem [thread:$0]  %s0, 2048, %s19, [#allocation4], 128, 128, 8
    $region5: #{tpu_custom_call.1} parent=1 // pred_fallthru
      _
    // Predicated region
    $region6: #{tpu_custom_call.1} parent=1 // pred_check
      _
    $region7: #{tpu_custom_call.1} parent=1 // pred_check_branch
      %26 = sbr.rel (0) target = $region9
    $region8: #{tpu_custom_call.1} parent=1 // pred_region
      %s28 = ssub.s32 256, 256
      %29 = vsyncadd [#allocation7], %s28
      %s30 = sshll.u32 [#allocation6], 4
      %s31 = int_to_ptr.vmem [resolvable:$true] %s30
      %36 = dma.hbm_to_vmem [thread:$0]  %s1, 256, %s31, [#allocation7], 128, 128, 8
    $region9: #{tpu_custom_call.1} parent=1 // pred_fallthru
      _
    // Predicated region
    $region10: #{tpu_custom_call.1} parent=1 // pred_check
      _
    $region11: #{tpu_custom_call.1} parent=1 // pred_check_branch
      %38 = sbr.rel (0) target = $region13
    $region12: #{tpu_custom_call.1} parent=1 // pred_region
      %39 = dma.done [#allocation4], 2048
    $region13: #{tpu_custom_call.1} parent=1 // pred_fallthru
      _
    // Predicated region
    $region14: #{tpu_custom_call.1} parent=1 // pred_check
      _
    $region15: #{tpu_custom_call.1} parent=1 // pred_check_branch
      %41 = sbr.rel (0) target = $region17
    $region16: #{tpu_custom_call.1} parent=1 // pred_region
      %42 = dma.done [#allocation7], 256
    $region17: #{tpu_custom_call.1} parent=1 // pred_fallthru
      _
    %p43 = scmp.eq.s32.totalorder 0, 0
    // Predicated region
    $region18: #{tpu_custom_call.1} parent=1 // pred_check
      %p44 = pneg %p43
    $region19: #{tpu_custom_call.1} parent=1 // pred_check_branch
      %46 = sbr.rel (%p44) target = $region21
    $region20: #{tpu_custom_call.1} parent=1 // pred_region
      %v47 = vld [vmem:[#allocation3] sm:$0xff]
      %v48 = vld [vmem:[#allocation3 + $0x8] sm:$0xff]
      %v49 = vld [vmem:[#allocation3 + $0x10] sm:$0xff]
      %v50 = vld [vmem:[#allocation3 + $0x18] sm:$0xff]
      %v51 = vld [vmem:[#allocation3 + $0x20] sm:$0xff]
      %v52 = vld [vmem:[#allocation3 + $0x28] sm:$0xff]
      %v53 = vld [vmem:[#allocation3 + $0x30] sm:$0xff]
      %v54 = vld [vmem:[#allocation3 + $0x38] sm:$0xff]
      %v55 = vld [vmem:[#allocation3 + $0x40] sm:$0xff]
      %v56 = vld [vmem:[#allocation3 + $0x48] sm:$0xff]
      %v57 = vld [vmem:[#allocation3 + $0x50] sm:$0xff]
      %v58 = vld [vmem:[#allocation3 + $0x58] sm:$0xff]
      %v59 = vld [vmem:[#allocation3 + $0x60] sm:$0xff]
      %v60 = vld [vmem:[#allocation3 + $0x68] sm:$0xff]
      %v61 = vld [vmem:[#allocation3 + $0x70] sm:$0xff]
      %v62 = vld [vmem:[#allocation3 + $0x78] sm:$0xff]
      %v63 = vlaneseq
      %v64 = vshrl.u32 %v63, 7
      %v65 = vadd.s32 %v64, 8
      %v66 = vadd.s32 %v64, 16
      %v67 = vadd.s32 %v64, 24
      %v68 = vadd.s32 %v64, 32
      %v69 = vadd.s32 %v64, 40
      %v70 = vadd.s32 %v64, 48
      %v71 = vadd.s32 %v64, 56
      %v72 = vadd.s32 %v64, 64
      %v73 = vadd.s32 %v64, 72
      %v74 = vadd.s32 %v64, 80
      %v75 = vadd.s32 %v64, 88
      %v76 = vadd.s32 %v64, 96
      %v77 = vadd.s32 %v64, 104
      %v78 = vadd.s32 %v64, 112
      %v79 = vadd.s32 %v64, 120
      %v80 = vlaneseq
      %v81 = vand.u32 %v80, 127
      %vm82 = vcmp.gt.s32.totalorder %v81, %v64
      %vm83 = vcmp.gt.s32.totalorder %v81, %v65
      %vm84 = vcmp.gt.s32.totalorder %v81, %v66
      %vm85 = vcmp.gt.s32.totalorder %v81, %v67
      %vm86 = vcmp.gt.s32.totalorder %v81, %v68
      %vm87 = vcmp.gt.s32.totalorder %v81, %v69
      %vm88 = vcmp.gt.s32.totalorder %v81, %v70
      %vm89 = vcmp.gt.s32.totalorder %v81, %v71
      %vm90 = vcmp.gt.s32.totalorder %v81, %v72
      %vm91 = vcmp.gt.s32.totalorder %v81, %v73
      %vm92 = vcmp.gt.s32.totalorder %v81, %v74
      %vm93 = vcmp.gt.s32.totalorder %v81, %v75
      %vm94 = vcmp.gt.s32.totalorder %v81, %v76
      %vm95 = vcmp.gt.s32.totalorder %v81, %v77
      %vm96 = vcmp.gt.s32.totalorder %v81, %v78
      %vm97 = vcmp.gt.s32.totalorder %v81, %v79
      %v98 = vsel %vm82, %v47, 0.0
      %v99 = vsel %vm83, %v48, 0.0
      %v100 = vsel %vm84, %v49, 0.0
      %v101 = vsel %vm85, %v50, 0.0
      %v102 = vsel %vm86, %v51, 0.0
      %v103 = vsel %vm87, %v52, 0.0
      %v104 = vsel %vm88, %v53, 0.0
      %v105 = vsel %vm89, %v54, 0.0
      %v106 = vsel %vm90, %v55, 0.0
      %v107 = vsel %vm91, %v56, 0.0
      %v108 = vsel %vm92, %v57, 0.0
      %v109 = vsel %vm93, %v58, 0.0
      %v110 = vsel %vm94, %v59, 0.0
      %v111 = vsel %vm95, %v60, 0.0
      %v112 = vsel %vm96, %v61, 0.0
      %v113 = vsel %vm97, %v62, 0.0
      %114 = vxpose.xlu0.b32.start [1/16] %v98, 128
      %115 = vxpose.xlu0.b32.cont [2/16] %v99, 128
      %116 = vxpose.xlu0.b32.cont [3/16] %v100, 128
      %117 = vxpose.xlu0.b32.cont [4/16] %v101, 128
      %118 = vxpose.xlu0.b32.cont [5/16] %v102, 128
      %119 = vxpose.xlu0.b32.cont [6/16] %v103, 128
      %120 = vxpose.xlu0.b32.cont [7/16] %v104, 128
      %121 = vxpose.xlu0.b32.cont [8/16] %v105, 128
      %122 = vxpose.xlu0.b32.cont [9/16] %v106, 128
      %123 = vxpose.xlu0.b32.cont [10/16] %v107, 128
      %124 = vxpose.xlu0.b32.cont [11/16] %v108, 128
      %125 = vxpose.xlu0.b32.cont [12/16] %v109, 128
      %126 = vxpose.xlu0.b32.cont [13/16] %v110, 128
      %127 = vxpose.xlu0.b32.cont [14/16] %v111, 128
      %128 = vxpose.xlu0.b32.cont [15/16] %v112, 128
      %129 = vxpose.xlu0.b32.end [16/16] %v113, 128
      %v130 = vpop.trf.xlu0
      %v131 = vpop.trf.xlu0
      %v132 = vpop.trf.xlu0
      %v133 = vpop.trf.xlu0
      %v134 = vpop.trf.xlu0
      %v135 = vpop.trf.xlu0
      %v136 = vpop.trf.xlu0
      %v137 = vpop.trf.xlu0
      %v138 = vpop.trf.xlu0
      %v139 = vpop.trf.xlu0
      %v140 = vpop.trf.xlu0
      %v141 = vpop.trf.xlu0
      %v142 = vpop.trf.xlu0
      %v143 = vpop.trf.xlu0
      %v144 = vpop.trf.xlu0
      %v145 = vpop.trf.xlu0
      %v146 = vsub.f32 %v98, %v130
      %v147 = vsub.f32 %v99, %v131
      %v148 = vsub.f32 %v100, %v132
      %v149 = vsub.f32 %v101, %v133
      %v150 = vsub.f32 %v102, %v134
      %v151 = vsub.f32 %v103, %v135
      %v152 = vsub.f32 %v104, %v136
      %v153 = vsub.f32 %v105, %v137
      %v154 = vsub.f32 %v106, %v138
      %v155 = vsub.f32 %v107, %v139
      %v156 = vsub.f32 %v108, %v140
      %v157 = vsub.f32 %v109, %v141
      %v158 = vsub.f32 %v110, %v142
      %v159 = vsub.f32 %v111, %v143
      %v160 = vsub.f32 %v112, %v144
      %v161 = vsub.f32 %v113, %v145
      %vm162 = vcmp.eq.s32.totalorder %v64, %v81
      %vm163 = vcmp.eq.s32.totalorder %v65, %v81
      %vm164 = vcmp.eq.s32.totalorder %v66, %v81
      %vm165 = vcmp.eq.s32.totalorder %v67, %v81
      %vm166 = vcmp.eq.s32.totalorder %v68, %v81
      %vm167 = vcmp.eq.s32.totalorder %v69, %v81
      %vm168 = vcmp.eq.s32.totalorder %v70, %v81
      %vm169 = vcmp.eq.s32.totalorder %v71, %v81
      %vm170 = vcmp.eq.s32.totalorder %v72, %v81
      %vm171 = vcmp.eq.s32.totalorder %v73, %v81
      %vm172 = vcmp.eq.s32.totalorder %v74, %v81
      %vm173 = vcmp.eq.s32.totalorder %v75, %v81
      %vm174 = vcmp.eq.s32.totalorder %v76, %v81
      %vm175 = vcmp.eq.s32.totalorder %v77, %v81
      %vm176 = vcmp.eq.s32.totalorder %v78, %v81
      %vm177 = vcmp.eq.s32.totalorder %v79, %v81
      %v178 = vsel %vm162, 1.0, 0.0
      %v179 = vsel %vm163, 1.0, 0.0
      %v180 = vsel %vm164, 1.0, 0.0
      %v181 = vsel %vm165, 1.0, 0.0
      %v182 = vsel %vm166, 1.0, 0.0
      %v183 = vsel %vm167, 1.0, 0.0
      %v184 = vsel %vm168, 1.0, 0.0
      %v185 = vsel %vm169, 1.0, 0.0
      %v186 = vsel %vm170, 1.0, 0.0
      %v187 = vsel %vm171, 1.0, 0.0
      %v188 = vsel %vm172, 1.0, 0.0
      %v189 = vsel %vm173, 1.0, 0.0
      %v190 = vsel %vm174, 1.0, 0.0
      %v191 = vsel %vm175, 1.0, 0.0
      %v192 = vsel %vm176, 1.0, 0.0
      %v193 = vsel %vm177, 1.0, 0.0
      %v194 = vmul.f32 %v146, 0.0625
      %v195 = vmul.f32 %v147, 0.0625
      %v196 = vmul.f32 %v148, 0.0625
      %v197 = vmul.f32 %v149, 0.0625
      %v198 = vmul.f32 %v150, 0.0625
      %v199 = vmul.f32 %v151, 0.0625
      %v200 = vmul.f32 %v152, 0.0625
      %v201 = vmul.f32 %v153, 0.0625
      %v202 = vmul.f32 %v154, 0.0625
      %v203 = vmul.f32 %v155, 0.0625
      %v204 = vmul.f32 %v156, 0.0625
      %v205 = vmul.f32 %v157, 0.0625
      %v206 = vmul.f32 %v158, 0.0625
      %v207 = vmul.f32 %v159, 0.0625
      %v208 = vmul.f32 %v160, 0.0625
      %v209 = vmul.f32 %v161, 0.0625
      %210 = vmatprep.subr.mxu0 0.0
      %211 = vmatpush1.msra.mxu0 %v209
      %212 = vmatprep.subr.mxu0 0.0
      %213 = vmatpush1.msra.mxu0 %v208
      %214 = vmatprep.subr.mxu0 0.0
      %215 = vmatpush1.msra.mxu0 %v207
      %216 = vmatprep.subr.mxu0 0.0
      %217 = vmatpush1.msra.mxu0 %v206
      %218 = vmatprep.subr.mxu0 0.0
      %219 = vmatpush1.msra.mxu0 %v205
      %220 = vmatprep.subr.mxu0 0.0
      %221 = vmatpush1.msra.mxu0 %v204
      %222 = vmatprep.subr.mxu0 0.0
      %223 = vmatpush1.msra.mxu0 %v203
      %224 = vmatprep.subr.mxu0 0.0
      %225 = vmatpush1.msra.mxu0 %v202
      %226 = vmatprep.subr.mxu0 0.0
      %227 = vmatpush1.msra.mxu0 %v201
      %228 = vmatprep.subr.mxu0 0.0
      %229 = vmatpush1.msra.mxu0 %v200
      %230 = vmatprep.subr.mxu0 0.0
      %231 = vmatpush1.msra.mxu0 %v199
      %232 = vmatprep.subr.mxu0 0.0
      %233 = vmatpush1.msra.mxu0 %v198
      %234 = vmatprep.subr.mxu0 0.0
      %235 = vmatpush1.msra.mxu0 %v197
      %236 = vmatprep.subr.mxu0 0.0
      %237 = vmatpush1.msra.mxu0 %v196
      %238 = vmatprep.subr.mxu0 0.0
      %239 = vmatpush1.msra.mxu0 %v195
      %240 = vmatprep.subr.mxu0 0.0
      %241 = vmatpush1.msra.mxu0 %v194
      %242 = vmatprep.subr.mxu0 0.0
      %243 = vmatpush2.msra.mxu0 0.0
      %244 = vmatprep.subr.mxu0 0.0
      %245 = vmatpush2.msra.mxu0 0.0
      %246 = vmatprep.subr.mxu0 0.0
      %247 = vmatpush2.msra.mxu0 0.0
      %248 = vmatprep.subr.mxu0 0.0
      %249 = vmatpush2.msra.mxu0 0.0
      %250 = vmatprep.subr.mxu0 0.0
      %251 = vmatpush2.msra.mxu0 0.0
      %252 = vmatprep.subr.mxu0 0.0
      %253 = vmatpush2.msra.mxu0 0.0
      %254 = vmatprep.subr.mxu0 0.0
      %255 = vmatpush2.msra.mxu0 0.0
      %256 = vmatprep.subr.mxu0 0.0
      %257 = vmatpush2.msra.mxu0 0.0
      %258 = vmatprep.subr.mxu0 0.0
      %259 = vmatpush2.msra.mxu0 0.0
      %260 = vmatprep.subr.mxu0 0.0
      %261 = vmatpush2.msra.mxu0 0.0
      %262 = vmatprep.subr.mxu0 0.0
      %263 = vmatpush2.msra.mxu0 0.0
      %264 = vmatprep.subr.mxu0 0.0
      %265 = vmatpush2.msra.mxu0 0.0
      %266 = vmatprep.subr.mxu0 0.0
      %267 = vmatpush2.msra.mxu0 0.0
      %268 = vmatprep.subr.mxu0 0.0
      %269 = vmatpush2.msra.mxu0 0.0
      %270 = vmatprep.subr.mxu0 0.0
      %271 = vmatpush2.msra.mxu0 0.0
      %272 = vmatprep.subr.mxu0 0.0
      %273 = vmatpush2.msra.mxu0 0.0
      %274 = vmatprep.mubr.f32.mxu0 0.0
      %275 = vmatmul.mubr.f32.gmra.mxu0 %v194
      %v276 = vpop.f32.mrf.mxu0
      %v277 = vadd.f32 0.0, %v276
      %v278 = vpop.f32.mrf.mxu0
      %279 = vmatprep.mubr.f32.mxu0 0.0
      %280 = vmatmul.mubr.f32.gmra.mxu0 %v195
      %v281 = vpop.f32.mrf.mxu0
      %v282 = vadd.f32 0.0, %v281
      %v283 = vpop.f32.mrf.mxu0
      %284 = vmatprep.mubr.f32.mxu0 0.0
      %285 = vmatmul.mubr.f32.gmra.mxu0 %v196
      %v286 = vpop.f32.mrf.mxu0
      %v287 = vadd.f32 0.0, %v286
      %v288 = vpop.f32.mrf.mxu0
      %289 = vmatprep.mubr.f32.mxu0 0.0
      %290 = vmatmul.mubr.f32.gmra.mxu0 %v197
      %v291 = vpop.f32.mrf.mxu0
      %v292 = vadd.f32 0.0, %v291
      %v293 = vpop.f32.mrf.mxu0
      %294 = vmatprep.mubr.f32.mxu0 0.0
      %295 = vmatmul.mubr.f32.gmra.mxu0 %v198
      %v296 = vpop.f32.mrf.mxu0
      %v297 = vadd.f32 0.0, %v296
      %v298 = vpop.f32.mrf.mxu0
      %299 = vmatprep.mubr.f32.mxu0 0.0
      %300 = vmatmul.mubr.f32.gmra.mxu0 %v199
      %v301 = vpop.f32.mrf.mxu0
      %v302 = vadd.f32 0.0, %v301
      %v303 = vpop.f32.mrf.mxu0
      %304 = vmatprep.mubr.f32.mxu0 0.0
      %305 = vmatmul.mubr.f32.gmra.mxu0 %v200
      %v306 = vpop.f32.mrf.mxu0
      %v307 = vadd.f32 0.0, %v306
      %v308 = vpop.f32.mrf.mxu0
      %309 = vmatprep.mubr.f32.mxu0 0.0
      %310 = vmatmul.mubr.f32.gmra.mxu0 %v201
      %v311 = vpop.f32.mrf.mxu0
      %v312 = vadd.f32 0.0, %v311
      %v313 = vpop.f32.mrf.mxu0
      %314 = vmatprep.mubr.f32.mxu0 0.0
      %315 = vmatmul.mubr.f32.gmra.mxu0 %v202
      %v316 = vpop.f32.mrf.mxu0
      %v317 = vadd.f32 0.0, %v316
      %v318 = vpop.f32.mrf.mxu0
      %319 = vmatprep.mubr.f32.mxu0 0.0
      %320 = vmatmul.mubr.f32.gmra.mxu0 %v203
      %v321 = vpop.f32.mrf.mxu0
      %v322 = vadd.f32 0.0, %v321
      %v323 = vpop.f32.mrf.mxu0
      %324 = vmatprep.mubr.f32.mxu0 0.0
      %325 = vmatmul.mubr.f32.gmra.mxu0 %v204
      %v326 = vpop.f32.mrf.mxu0
      %v327 = vadd.f32 0.0, %v326
      %v328 = vpop.f32.mrf.mxu0
      %329 = vmatprep.mubr.f32.mxu0 0.0
      %330 = vmatmul.mubr.f32.gmra.mxu0 %v205
      %v331 = vpop.f32.mrf.mxu0
      %v332 = vadd.f32 0.0, %v331
      %v333 = vpop.f32.mrf.mxu0
      %334 = vmatprep.mubr.f32.mxu0 0.0
      %335 = vmatmul.mubr.f32.gmra.mxu0 %v206
      %v336 = vpop.f32.mrf.mxu0
      %v337 = vadd.f32 0.0, %v336
      %v338 = vpop.f32.mrf.mxu0
      %339 = vmatprep.mubr.f32.mxu0 0.0
      %340 = vmatmul.mubr.f32.gmra.mxu0 %v207
      %v341 = vpop.f32.mrf.mxu0
      %v342 = vadd.f32 0.0, %v341
      %v343 = vpop.f32.mrf.mxu0
      %344 = vmatprep.mubr.f32.mxu0 0.0
      %345 = vmatmul.mubr.f32.gmra.mxu0 %v208
      %v346 = vpop.f32.mrf.mxu0
      %v347 = vadd.f32 0.0, %v346
      %v348 = vpop.f32.mrf.mxu0
      %349 = vmatprep.mubr.f32.mxu0 0.0
      %350 = vmatmul.mubr.f32.gmra.mxu0 %v209
      %v351 = vpop.f32.mrf.mxu0
      %v352 = vadd.f32 0.0, %v351
      %v353 = vpop.f32.mrf.mxu0
      %354 = vdwg.mxu0
      %355 = vmatprep.subr.mxu0 0.0
      %356 = vmatpush1.msra.mxu0 %v209
      %357 = vmatprep.subr.mxu0 0.0
      %358 = vmatpush1.msra.mxu0 %v208
      %359 = vmatprep.subr.mxu0 0.0
      %360 = vmatpush1.msra.mxu0 %v207
      %361 = vmatprep.subr.mxu0 0.0
      %362 = vmatpush1.msra.mxu0 %v206
      %363 = vmatprep.subr.mxu0 0.0
      %364 = vmatpush1.msra.mxu0 %v205
      %365 = vmatprep.subr.mxu0 0.0
      %366 = vmatpush1.msra.mxu0 %v204
      %367 = vmatprep.subr.mxu0 0.0
      %368 = vmatpush1.msra.mxu0 %v203
      %369 = vmatprep.subr.mxu0 0.0
      %370 = vmatpush1.msra.mxu0 %v202
      %371 = vmatprep.subr.mxu0 0.0
      %372 = vmatpush1.msra.mxu0 %v201
      %373 = vmatprep.subr.mxu0 0.0
      %374 = vmatpush1.msra.mxu0 %v200
      %375 = vmatprep.subr.mxu0 0.0
      %376 = vmatpush1.msra.mxu0 %v199
      %377 = vmatprep.subr.mxu0 0.0
      %378 = vmatpush1.msra.mxu0 %v198
      %379 = vmatprep.subr.mxu0 0.0
      %380 = vmatpush1.msra.mxu0 %v197
      %381 = vmatprep.subr.mxu0 0.0
      %382 = vmatpush1.msra.mxu0 %v196
      %383 = vmatprep.subr.mxu0 0.0
      %384 = vmatpush1.msra.mxu0 %v195
      %385 = vmatprep.subr.mxu0 0.0
      %386 = vmatpush1.msra.mxu0 %v194
      %387 = vmatprep.subr.mxu0 0.0
      %388 = vmatpush2.msra.mxu0 0.0
      %389 = vmatprep.subr.mxu0 0.0
      %390 = vmatpush2.msra.mxu0 0.0
      %391 = vmatprep.subr.mxu0 0.0
      %392 = vmatpush2.msra.mxu0 0.0
      %393 = vmatprep.subr.mxu0 0.0
      %394 = vmatpush2.msra.mxu0 0.0
      %395 = vmatprep.subr.mxu0 0.0
      %396 = vmatpush2.msra.mxu0 0.0
      %397 = vmatprep.subr.mxu0 0.0
      %398 = vmatpush2.msra.mxu0 0.0
      %399 = vmatprep.subr.mxu0 0.0
      %400 = vmatpush2.msra.mxu0 0.0
      %401 = vmatprep.subr.mxu0 0.0
      %402 = vmatpush2.msra.mxu0 0.0
      %403 = vmatprep.subr.mxu0 0.0
      %404 = vmatpush2.msra.mxu0 0.0
      %405 = vmatprep.subr.mxu0 0.0
      %406 = vmatpush2.msra.mxu0 0.0
      %407 = vmatprep.subr.mxu0 0.0
      %408 = vmatpush2.msra.mxu0 0.0
      %409 = vmatprep.subr.mxu0 0.0
      %410 = vmatpush2.msra.mxu0 0.0
      %411 = vmatprep.subr.mxu0 0.0
      %412 = vmatpush2.msra.mxu0 0.0
      %413 = vmatprep.subr.mxu0 0.0
      %414 = vmatpush2.msra.mxu0 0.0
      %415 = vmatprep.subr.mxu0 0.0
      %416 = vmatpush2.msra.mxu0 0.0
      %417 = vmatprep.subr.mxu0 0.0
      %418 = vmatpush2.msra.mxu0 0.0
      %419 = vmatprep.mubr.f32.mxu0 0.0
      %420 = vmatmul.mubr.f32.gmra.mxu0 %v277
      %v421 = vpop.f32.mrf.mxu0
      %v422 = vadd.f32 0.0, %v421
      %v423 = vpop.f32.mrf.mxu0
      %424 = vmatprep.mubr.f32.mxu0 0.0
      %425 = vmatmul.mubr.f32.gmra.mxu0 %v282
      %v426 = vpop.f32.mrf.mxu0
      %v427 = vadd.f32 0.0, %v426
      %v428 = vpop.f32.mrf.mxu0
      %429 = vmatprep.mubr.f32.mxu0 0.0
      %430 = vmatmul.mubr.f32.gmra.mxu0 %v287
      %v431 = vpop.f32.mrf.mxu0
      %v432 = vadd.f32 0.0, %v431
      %v433 = vpop.f32.mrf.mxu0
      %434 = vmatprep.mubr.f32.mxu0 0.0
      %435 = vmatmul.mubr.f32.gmra.mxu0 %v292
      %v436 = vpop.f32.mrf.mxu0
      %v437 = vadd.f32 0.0, %v436
      %v438 = vpop.f32.mrf.mxu0
      %439 = vmatprep.mubr.f32.mxu0 0.0
      %440 = vmatmul.mubr.f32.gmra.mxu0 %v297
      %v441 = vpop.f32.mrf.mxu0
      %v442 = vadd.f32 0.0, %v441
      %v443 = vpop.f32.mrf.mxu0
      %444 = vmatprep.mubr.f32.mxu0 0.0
      %445 = vmatmul.mubr.f32.gmra.mxu0 %v302
      %v446 = vpop.f32.mrf.mxu0
      %v447 = vadd.f32 0.0, %v446
      %v448 = vpop.f32.mrf.mxu0
      %449 = vmatprep.mubr.f32.mxu0 0.0
      %450 = vmatmul.mubr.f32.gmra.mxu0 %v307
      %v451 = vpop.f32.mrf.mxu0
      %v452 = vadd.f32 0.0, %v451
      %v453 = vpop.f32.mrf.mxu0
      %454 = vmatprep.mubr.f32.mxu0 0.0
      %455 = vmatmul.mubr.f32.gmra.mxu0 %v312
      %v456 = vpop.f32.mrf.mxu0
      %v457 = vadd.f32 0.0, %v456
      %v458 = vpop.f32.mrf.mxu0
      %459 = vmatprep.mubr.f32.mxu0 0.0
      %460 = vmatmul.mubr.f32.gmra.mxu0 %v317
      %v461 = vpop.f32.mrf.mxu0
      %v462 = vadd.f32 0.0, %v461
      %v463 = vpop.f32.mrf.mxu0
      %464 = vmatprep.mubr.f32.mxu0 0.0
      %465 = vmatmul.mubr.f32.gmra.mxu0 %v322
      %v466 = vpop.f32.mrf.mxu0
      %v467 = vadd.f32 0.0, %v466
      %v468 = vpop.f32.mrf.mxu0
      %469 = vmatprep.mubr.f32.mxu0 0.0
      %470 = vmatmul.mubr.f32.gmra.mxu0 %v327
      %v471 = vpop.f32.mrf.mxu0
      %v472 = vadd.f32 0.0, %v471
      %v473 = vpop.f32.mrf.mxu0
      %474 = vmatprep.mubr.f32.mxu0 0.0
      %475 = vmatmul.mubr.f32.gmra.mxu0 %v332
      %v476 = vpop.f32.mrf.mxu0
      %v477 = vadd.f32 0.0, %v476
      %v478 = vpop.f32.mrf.mxu0
      %479 = vmatprep.mubr.f32.mxu0 0.0
      %480 = vmatmul.mubr.f32.gmra.mxu0 %v337
      %v481 = vpop.f32.mrf.mxu0
      %v482 = vadd.f32 0.0, %v481
      %v483 = vpop.f32.mrf.mxu0
      %484 = vmatprep.mubr.f32.mxu0 0.0
      %485 = vmatmul.mubr.f32.gmra.mxu0 %v342
      %v486 = vpop.f32.mrf.mxu0
      %v487 = vadd.f32 0.0, %v486
      %v488 = vpop.f32.mrf.mxu0
      %489 = vmatprep.mubr.f32.mxu0 0.0
      %490 = vmatmul.mubr.f32.gmra.mxu0 %v347
      %v491 = vpop.f32.mrf.mxu0
      %v492 = vadd.f32 0.0, %v491
      %v493 = vpop.f32.mrf.mxu0
      %494 = vmatprep.mubr.f32.mxu0 0.0
      %495 = vmatmul.mubr.f32.gmra.mxu0 %v352
      %v496 = vpop.f32.mrf.mxu0
      %v497 = vadd.f32 0.0, %v496
      %v498 = vpop.f32.mrf.mxu0
      %499 = vdwg.mxu0
      %500 = vmatprep.subr.mxu0 0.0
      %501 = vmatpush1.msra.mxu0 %v352
      %502 = vmatprep.subr.mxu0 0.0
      %503 = vmatpush1.msra.mxu0 %v347
      %504 = vmatprep.subr.mxu0 0.0
      %505 = vmatpush1.msra.mxu0 %v342
      %506 = vmatprep.subr.mxu0 0.0
      %507 = vmatpush1.msra.mxu0 %v337
      %508 = vmatprep.subr.mxu0 0.0
      %509 = vmatpush1.msra.mxu0 %v332
      %510 = vmatprep.subr.mxu0 0.0
      %511 = vmatpush1.msra.mxu0 %v327
      %512 = vmatprep.subr.mxu0 0.0
      %513 = vmatpush1.msra.mxu0 %v322
      %514 = vmatprep.subr.mxu0 0.0
      %515 = vmatpush1.msra.mxu0 %v317
      %516 = vmatprep.subr.mxu0 0.0
      %517 = vmatpush1.msra.mxu0 %v312
      %518 = vmatprep.subr.mxu0 0.0
      %519 = vmatpush1.msra.mxu0 %v307
      %520 = vmatprep.subr.mxu0 0.0
      %521 = vmatpush1.msra.mxu0 %v302
      %522 = vmatprep.subr.mxu0 0.0
      %523 = vmatpush1.msra.mxu0 %v297
      %524 = vmatprep.subr.mxu0 0.0
      %525 = vmatpush1.msra.mxu0 %v292
      %526 = vmatprep.subr.mxu0 0.0
      %527 = vmatpush1.msra.mxu0 %v287
      %528 = vmatprep.subr.mxu0 0.0
      %529 = vmatpush1.msra.mxu0 %v282
      %530 = vmatprep.subr.mxu0 0.0
      %531 = vmatpush1.msra.mxu0 %v277
      %532 = vmatprep.subr.mxu0 0.0
      %533 = vmatpush2.msra.mxu0 0.0
      %534 = vmatprep.subr.mxu0 0.0
      %535 = vmatpush2.msra.mxu0 0.0
      %536 = vmatprep.subr.mxu0 0.0
      %537 = vmatpush2.msra.mxu0 0.0
      %538 = vmatprep.subr.mxu0 0.0
      %539 = vmatpush2.msra.mxu0 0.0
      %540 = vmatprep.subr.mxu0 0.0
      %541 = vmatpush2.msra.mxu0 0.0
      %542 = vmatprep.subr.mxu0 0.0
      %543 = vmatpush2.msra.mxu0 0.0
      %544 = vmatprep.subr.mxu0 0.0
      %545 = vmatpush2.msra.mxu0 0.0
      %546 = vmatprep.subr.mxu0 0.0
      %547 = vmatpush2.msra.mxu0 0.0
      %548 = vmatprep.subr.mxu0 0.0
      %549 = vmatpush2.msra.mxu0 0.0
      %550 = vmatprep.subr.mxu0 0.0
      %551 = vmatpush2.msra.mxu0 0.0
      %552 = vmatprep.subr.mxu0 0.0
      %553 = vmatpush2.msra.mxu0 0.0
      %554 = vmatprep.subr.mxu0 0.0
      %555 = vmatpush2.msra.mxu0 0.0
      %556 = vmatprep.subr.mxu0 0.0
      %557 = vmatpush2.msra.mxu0 0.0
      %558 = vmatprep.subr.mxu0 0.0
      %559 = vmatpush2.msra.mxu0 0.0
      %560 = vmatprep.subr.mxu0 0.0
      %561 = vmatpush2.msra.mxu0 0.0
      %562 = vmatprep.subr.mxu0 0.0
      %563 = vmatpush2.msra.mxu0 0.0
      %564 = vmatprep.mubr.f32.mxu0 0.0
      %565 = vmatmul.mubr.f32.gmra.mxu0 %v277
      %v566 = vpop.f32.mrf.mxu0
      %v567 = vadd.f32 0.0, %v566
      %v568 = vpop.f32.mrf.mxu0
      %569 = vmatprep.mubr.f32.mxu0 0.0
      %570 = vmatmul.mubr.f32.gmra.mxu0 %v282
      %v571 = vpop.f32.mrf.mxu0
      %v572 = vadd.f32 0.0, %v571
      %v573 = vpop.f32.mrf.mxu0
      %574 = vmatprep.mubr.f32.mxu0 0.0
      %575 = vmatmul.mubr.f32.gmra.mxu0 %v287
      %v576 = vpop.f32.mrf.mxu0
      %v577 = vadd.f32 0.0, %v576
      %v578 = vpop.f32.mrf.mxu0
      %579 = vmatprep.mubr.f32.mxu0 0.0
      %580 = vmatmul.mubr.f32.gmra.mxu0 %v292
      %v581 = vpop.f32.mrf.mxu0
      %v582 = vadd.f32 0.0, %v581
      %v583 = vpop.f32.mrf.mxu0
      %584 = vmatprep.mubr.f32.mxu0 0.0
      %585 = vmatmul.mubr.f32.gmra.mxu0 %v297
      %v586 = vpop.f32.mrf.mxu0
      %v587 = vadd.f32 0.0, %v586
      %v588 = vpop.f32.mrf.mxu0
      %589 = vmatprep.mubr.f32.mxu0 0.0
      %590 = vmatmul.mubr.f32.gmra.mxu0 %v302
      %v591 = vpop.f32.mrf.mxu0
      %v592 = vadd.f32 0.0, %v591
      %v593 = vpop.f32.mrf.mxu0
      %594 = vmatprep.mubr.f32.mxu0 0.0
      %595 = vmatmul.mubr.f32.gmra.mxu0 %v307
      %v596 = vpop.f32.mrf.mxu0
      %v597 = vadd.f32 0.0, %v596
      %v598 = vpop.f32.mrf.mxu0
      %599 = vmatprep.mubr.f32.mxu0 0.0
      %600 = vmatmul.mubr.f32.gmra.mxu0 %v312
      %v601 = vpop.f32.mrf.mxu0
      %v602 = vadd.f32 0.0, %v601
      %v603 = vpop.f32.mrf.mxu0
      %604 = vmatprep.mubr.f32.mxu0 0.0
      %605 = vmatmul.mubr.f32.gmra.mxu0 %v317
      %v606 = vpop.f32.mrf.mxu0
      %v607 = vadd.f32 0.0, %v606
      %v608 = vpop.f32.mrf.mxu0
      %609 = vmatprep.mubr.f32.mxu0 0.0
      %610 = vmatmul.mubr.f32.gmra.mxu0 %v322
      %v611 = vpop.f32.mrf.mxu0
      %v612 = vadd.f32 0.0, %v611
      %v613 = vpop.f32.mrf.mxu0
      %614 = vmatprep.mubr.f32.mxu0 0.0
      %615 = vmatmul.mubr.f32.gmra.mxu0 %v327
      %v616 = vpop.f32.mrf.mxu0
      %v617 = vadd.f32 0.0, %v616
      %v618 = vpop.f32.mrf.mxu0
      %619 = vmatprep.mubr.f32.mxu0 0.0
      %620 = vmatmul.mubr.f32.gmra.mxu0 %v332
      %v621 = vpop.f32.mrf.mxu0
      %v622 = vadd.f32 0.0, %v621
      %v623 = vpop.f32.mrf.mxu0
      %624 = vmatprep.mubr.f32.mxu0 0.0
      %625 = vmatmul.mubr.f32.gmra.mxu0 %v337
      %v626 = vpop.f32.mrf.mxu0
      %v627 = vadd.f32 0.0, %v626
      %v628 = vpop.f32.mrf.mxu0
      %629 = vmatprep.mubr.f32.mxu0 0.0
      %630 = vmatmul.mubr.f32.gmra.mxu0 %v342
      %v631 = vpop.f32.mrf.mxu0
      %v632 = vadd.f32 0.0, %v631
      %v633 = vpop.f32.mrf.mxu0
      %634 = vmatprep.mubr.f32.mxu0 0.0
      %635 = vmatmul.mubr.f32.gmra.mxu0 %v347
      %v636 = vpop.f32.mrf.mxu0
      %v637 = vadd.f32 0.0, %v636
      %v638 = vpop.f32.mrf.mxu0
      %639 = vmatprep.mubr.f32.mxu0 0.0
      %640 = vmatmul.mubr.f32.gmra.mxu0 %v352
      %v641 = vpop.f32.mrf.mxu0
      %v642 = vadd.f32 0.0, %v641
      %v643 = vpop.f32.mrf.mxu0
      %644 = vdwg.mxu0
      %v645 = vadd.f32 %v178, %v194
      %v646 = vadd.f32 %v179, %v195
      %v647 = vadd.f32 %v180, %v196
      %v648 = vadd.f32 %v181, %v197
      %v649 = vadd.f32 %v182, %v198
      %v650 = vadd.f32 %v183, %v199
      %v651 = vadd.f32 %v184, %v200
      %v652 = vadd.f32 %v185, %v201
      %v653 = vadd.f32 %v186, %v202
      %v654 = vadd.f32 %v187, %v203
      %v655 = vadd.f32 %v188, %v204
      %v656 = vadd.f32 %v189, %v205
      %v657 = vadd.f32 %v190, %v206
      %v658 = vadd.f32 %v191, %v207
      %v659 = vadd.f32 %v192, %v208
      %v660 = vadd.f32 %v193, %v209
      %v661 = vmul.f32 %v277, 0.5
      %v662 = vmul.f32 %v282, 0.5
      %v663 = vmul.f32 %v287, 0.5
      %v664 = vmul.f32 %v292, 0.5
      %v665 = vmul.f32 %v297, 0.5
      %v666 = vmul.f32 %v302, 0.5
      %v667 = vmul.f32 %v307, 0.5
      %v668 = vmul.f32 %v312, 0.5
      %v669 = vmul.f32 %v317, 0.5
      %v670 = vmul.f32 %v322, 0.5
      %v671 = vmul.f32 %v327, 0.5
      %v672 = vmul.f32 %v332, 0.5
      %v673 = vmul.f32 %v337, 0.5
      %v674 = vmul.f32 %v342, 0.5
      %v675 = vmul.f32 %v347, 0.5
      %v676 = vmul.f32 %v352, 0.5
      %v677 = vadd.f32 %v645, %v661
      %v678 = vadd.f32 %v646, %v662
      %v679 = vadd.f32 %v647, %v663
      %v680 = vadd.f32 %v648, %v664
      %v681 = vadd.f32 %v649, %v665
      %v682 = vadd.f32 %v650, %v666
      %v683 = vadd.f32 %v651, %v667
      %v684 = vadd.f32 %v652, %v668
      %v685 = vadd.f32 %v653, %v669
      %v686 = vadd.f32 %v654, %v670
      %v687 = vadd.f32 %v655, %v671
      %v688 = vadd.f32 %v656, %v672
      %v689 = vadd.f32 %v657, %v673
      %v690 = vadd.f32 %v658, %v674
      %v691 = vadd.f32 %v659, %v675
      %v692 = vadd.f32 %v660, %v676
      %v693 = vmul.f32 %v422, 0.16666667
      %v694 = vmul.f32 %v427, 0.16666667
      %v695 = vmul.f32 %v432, 0.16666667
      %v696 = vmul.f32 %v437, 0.16666667
      %v697 = vmul.f32 %v442, 0.16666667
      %v698 = vmul.f32 %v447, 0.16666667
      %v699 = vmul.f32 %v452, 0.16666667
      %v700 = vmul.f32 %v457, 0.16666667
      %v701 = vmul.f32 %v462, 0.16666667
      %v702 = vmul.f32 %v467, 0.16666667
      %v703 = vmul.f32 %v472, 0.16666667
      %v704 = vmul.f32 %v477, 0.16666667
      %v705 = vmul.f32 %v482, 0.16666667
      %v706 = vmul.f32 %v487, 0.16666667
      %v707 = vmul.f32 %v492, 0.16666667
      %v708 = vmul.f32 %v497, 0.16666667
      %v709 = vadd.f32 %v677, %v693
      %v710 = vadd.f32 %v678, %v694
      %v711 = vadd.f32 %v679, %v695
      %v712 = vadd.f32 %v680, %v696
      %v713 = vadd.f32 %v681, %v697
      %v714 = vadd.f32 %v682, %v698
      %v715 = vadd.f32 %v683, %v699
      %v716 = vadd.f32 %v684, %v700
      %v717 = vadd.f32 %v685, %v701
      %v718 = vadd.f32 %v686, %v702
      %v719 = vadd.f32 %v687, %v703
      %v720 = vadd.f32 %v688, %v704
      %v721 = vadd.f32 %v689, %v705
      %v722 = vadd.f32 %v690, %v706
      %v723 = vadd.f32 %v691, %v707
      %v724 = vadd.f32 %v692, %v708
      %v725 = vmul.f32 %v178, 0.041666668
      %v726 = vmul.f32 %v179, 0.041666668
      %v727 = vmul.f32 %v180, 0.041666668
      %v728 = vmul.f32 %v181, 0.041666668
      %v729 = vmul.f32 %v182, 0.041666668
      %v730 = vmul.f32 %v183, 0.041666668
      %v731 = vmul.f32 %v184, 0.041666668
      %v732 = vmul.f32 %v185, 0.041666668
      %v733 = vmul.f32 %v186, 0.041666668
      %v734 = vmul.f32 %v187, 0.041666668
      %v735 = vmul.f32 %v188, 0.041666668
      %v736 = vmul.f32 %v189, 0.041666668
      %v737 = vmul.f32 %v190, 0.041666668
      %v738 = vmul.f32 %v191, 0.041666668
      %v739 = vmul.f32 %v192, 0.041666668
      %v740 = vmul.f32 %v193, 0.041666668
      %v741 = vmul.f32 %v194, 0.008333334
      %v742 = vmul.f32 %v195, 0.008333334
      %v743 = vmul.f32 %v196, 0.008333334
      %v744 = vmul.f32 %v197, 0.008333334
      %v745 = vmul.f32 %v198, 0.008333334
      %v746 = vmul.f32 %v199, 0.008333334
      %v747 = vmul.f32 %v200, 0.008333334
      %v748 = vmul.f32 %v201, 0.008333334
      %v749 = vmul.f32 %v202, 0.008333334
      %v750 = vmul.f32 %v203, 0.008333334
      %v751 = vmul.f32 %v204, 0.008333334
      %v752 = vmul.f32 %v205, 0.008333334
      %v753 = vmul.f32 %v206, 0.008333334
      %v754 = vmul.f32 %v207, 0.008333334
      %v755 = vmul.f32 %v208, 0.008333334
      %v756 = vmul.f32 %v209, 0.008333334
      %v757 = vadd.f32 %v725, %v741
      %v758 = vadd.f32 %v726, %v742
      %v759 = vadd.f32 %v727, %v743
      %v760 = vadd.f32 %v728, %v744
      %v761 = vadd.f32 %v729, %v745
      %v762 = vadd.f32 %v730, %v746
      %v763 = vadd.f32 %v731, %v747
      %v764 = vadd.f32 %v732, %v748
      %v765 = vadd.f32 %v733, %v749
      %v766 = vadd.f32 %v734, %v750
      %v767 = vadd.f32 %v735, %v751
      %v768 = vadd.f32 %v736, %v752
      %v769 = vadd.f32 %v737, %v753
      %v770 = vadd.f32 %v738, %v754
      %v771 = vadd.f32 %v739, %v755
      %v772 = vadd.f32 %v740, %v756
      %v773 = vmul.f32 %v277, 0.0013888889
      %v774 = vmul.f32 %v282, 0.0013888889
      %v775 = vmul.f32 %v287, 0.0013888889
      %v776 = vmul.f32 %v292, 0.0013888889
      %v777 = vmul.f32 %v297, 0.0013888889
      %v778 = vmul.f32 %v302, 0.0013888889
      %v779 = vmul.f32 %v307, 0.0013888889
      %v780 = vmul.f32 %v312, 0.0013888889
      %v781 = vmul.f32 %v317, 0.0013888889
      %v782 = vmul.f32 %v322, 0.0013888889
      %v783 = vmul.f32 %v327, 0.0013888889
      %v784 = vmul.f32 %v332, 0.0013888889
      %v785 = vmul.f32 %v337, 0.0013888889
      %v786 = vmul.f32 %v342, 0.0013888889
      %v787 = vmul.f32 %v347, 0.0013888889
      %v788 = vmul.f32 %v352, 0.0013888889
      %v789 = vadd.f32 %v757, %v773
      %v790 = vadd.f32 %v758, %v774
      %v791 = vadd.f32 %v759, %v775
      %v792 = vadd.f32 %v760, %v776
      %v793 = vadd.f32 %v761, %v777
      %v794 = vadd.f32 %v762, %v778
      %v795 = vadd.f32 %v763, %v779
      %v796 = vadd.f32 %v764, %v780
      %v797 = vadd.f32 %v765, %v781
      %v798 = vadd.f32 %v766, %v782
      %v799 = vadd.f32 %v767, %v783
      %v800 = vadd.f32 %v768, %v784
      %v801 = vadd.f32 %v769, %v785
      %v802 = vadd.f32 %v770, %v786
      %v803 = vadd.f32 %v771, %v787
      %v804 = vadd.f32 %v772, %v788
      %v805 = vmul.f32 %v422, 0.0001984127
      %v806 = vmul.f32 %v427, 0.0001984127
      %v807 = vmul.f32 %v432, 0.0001984127
      %v808 = vmul.f32 %v437, 0.0001984127
      %v809 = vmul.f32 %v442, 0.0001984127
      %v810 = vmul.f32 %v447, 0.0001984127
      %v811 = vmul.f32 %v452, 0.0001984127
      %v812 = vmul.f32 %v457, 0.0001984127
      %v813 = vmul.f32 %v462, 0.0001984127
      %v814 = vmul.f32 %v467, 0.0001984127
      %v815 = vmul.f32 %v472, 0.0001984127
      %v816 = vmul.f32 %v477, 0.0001984127
      %v817 = vmul.f32 %v482, 0.0001984127
      %v818 = vmul.f32 %v487, 0.0001984127
      %v819 = vmul.f32 %v492, 0.0001984127
      %v820 = vmul.f32 %v497, 0.0001984127
      %v821 = vadd.f32 %v789, %v805
      %v822 = vadd.f32 %v790, %v806
      %v823 = vadd.f32 %v791, %v807
      %v824 = vadd.f32 %v792, %v808
      %v825 = vadd.f32 %v793, %v809
      %v826 = vadd.f32 %v794, %v810
      %v827 = vadd.f32 %v795, %v811
      %v828 = vadd.f32 %v796, %v812
      %v829 = vadd.f32 %v797, %v813
      %v830 = vadd.f32 %v798, %v814
      %v831 = vadd.f32 %v799, %v815
      %v832 = vadd.f32 %v800, %v816
      %v833 = vadd.f32 %v801, %v817
      %v834 = vadd.f32 %v802, %v818
      %v835 = vadd.f32 %v803, %v819
      %v836 = vadd.f32 %v804, %v820
      %v837 = vmul.f32 %v178, 2.4801588e-05
      %v838 = vmul.f32 %v179, 2.4801588e-05
      %v839 = vmul.f32 %v180, 2.4801588e-05
      %v840 = vmul.f32 %v181, 2.4801588e-05
      %v841 = vmul.f32 %v182, 2.4801588e-05
      %v842 = vmul.f32 %v183, 2.4801588e-05
      %v843 = vmul.f32 %v184, 2.4801588e-05
      %v844 = vmul.f32 %v185, 2.4801588e-05
      %v845 = vmul.f32 %v186, 2.4801588e-05
      %v846 = vmul.f32 %v187, 2.4801588e-05
      %v847 = vmul.f32 %v188, 2.4801588e-05
      %v848 = vmul.f32 %v189, 2.4801588e-05
      %v849 = vmul.f32 %v190, 2.4801588e-05
      %v850 = vmul.f32 %v191, 2.4801588e-05
      %v851 = vmul.f32 %v192, 2.4801588e-05
      %v852 = vmul.f32 %v193, 2.4801588e-05
      %v853 = vmul.f32 %v194, 2.7557319e-06
      %v854 = vmul.f32 %v195, 2.7557319e-06
      %v855 = vmul.f32 %v196, 2.7557319e-06
      %v856 = vmul.f32 %v197, 2.7557319e-06
      %v857 = vmul.f32 %v198, 2.7557319e-06
      %v858 = vmul.f32 %v199, 2.7557319e-06
      %v859 = vmul.f32 %v200, 2.7557319e-06
      %v860 = vmul.f32 %v201, 2.7557319e-06
      %v861 = vmul.f32 %v202, 2.7557319e-06
      %v862 = vmul.f32 %v203, 2.7557319e-06
      %v863 = vmul.f32 %v204, 2.7557319e-06
      %v864 = vmul.f32 %v205, 2.7557319e-06
      %v865 = vmul.f32 %v206, 2.7557319e-06
      %v866 = vmul.f32 %v207, 2.7557319e-06
      %v867 = vmul.f32 %v208, 2.7557319e-06
      %v868 = vmul.f32 %v209, 2.7557319e-06
      %v869 = vadd.f32 %v837, %v853
      %v870 = vadd.f32 %v838, %v854
      %v871 = vadd.f32 %v839, %v855
      %v872 = vadd.f32 %v840, %v856
      %v873 = vadd.f32 %v841, %v857
      %v874 = vadd.f32 %v842, %v858
      %v875 = vadd.f32 %v843, %v859
      %v876 = vadd.f32 %v844, %v860
      %v877 = vadd.f32 %v845, %v861
      %v878 = vadd.f32 %v846, %v862
      %v879 = vadd.f32 %v847, %v863
      %v880 = vadd.f32 %v848, %v864
      %v881 = vadd.f32 %v849, %v865
      %v882 = vadd.f32 %v850, %v866
      %v883 = vadd.f32 %v851, %v867
      %v884 = vadd.f32 %v852, %v868
      %v885 = vmul.f32 %v277, 2.755732e-07
      %v886 = vmul.f32 %v282, 2.755732e-07
      %v887 = vmul.f32 %v287, 2.755732e-07
      %v888 = vmul.f32 %v292, 2.755732e-07
      %v889 = vmul.f32 %v297, 2.755732e-07
      %v890 = vmul.f32 %v302, 2.755732e-07
      %v891 = vmul.f32 %v307, 2.755732e-07
      %v892 = vmul.f32 %v312, 2.755732e-07
      %v893 = vmul.f32 %v317, 2.755732e-07
      %v894 = vmul.f32 %v322, 2.755732e-07
      %v895 = vmul.f32 %v327, 2.755732e-07
      %v896 = vmul.f32 %v332, 2.755732e-07
      %v897 = vmul.f32 %v337, 2.755732e-07
      %v898 = vmul.f32 %v342, 2.755732e-07
      %v899 = vmul.f32 %v347, 2.755732e-07
      %v900 = vmul.f32 %v352, 2.755732e-07
      %v901 = vadd.f32 %v869, %v885
      %v902 = vadd.f32 %v870, %v886
      %v903 = vadd.f32 %v871, %v887
      %v904 = vadd.f32 %v872, %v888
      %v905 = vadd.f32 %v873, %v889
      %v906 = vadd.f32 %v874, %v890
      %v907 = vadd.f32 %v875, %v891
      %v908 = vadd.f32 %v876, %v892
      %v909 = vadd.f32 %v877, %v893
      %v910 = vadd.f32 %v878, %v894
      %v911 = vadd.f32 %v879, %v895
      %v912 = vadd.f32 %v880, %v896
      %v913 = vadd.f32 %v881, %v897
      %v914 = vadd.f32 %v882, %v898
      %v915 = vadd.f32 %v883, %v899
      %v916 = vadd.f32 %v884, %v900
      %917 = vmatprep.subr.mxu0 0.0
      %918 = vmatpush1.msra.mxu0 %v916
      %919 = vmatprep.subr.mxu0 0.0
      %920 = vmatpush1.msra.mxu0 %v915
      %921 = vmatprep.subr.mxu0 0.0
      %922 = vmatpush1.msra.mxu0 %v914
      %923 = vmatprep.subr.mxu0 0.0
      %924 = vmatpush1.msra.mxu0 %v913
      %925 = vmatprep.subr.mxu0 0.0
      %926 = vmatpush1.msra.mxu0 %v912
      %927 = vmatprep.subr.mxu0 0.0
      %928 = vmatpush1.msra.mxu0 %v911
      %929 = vmatprep.subr.mxu0 0.0
      %930 = vmatpush1.msra.mxu0 %v910
      %931 = vmatprep.subr.mxu0 0.0
      %932 = vmatpush1.msra.mxu0 %v909
      %933 = vmatprep.subr.mxu0 0.0
      %934 = vmatpush1.msra.mxu0 %v908
      %935 = vmatprep.subr.mxu0 0.0
      %936 = vmatpush1.msra.mxu0 %v907
      %937 = vmatprep.subr.mxu0 0.0
      %938 = vmatpush1.msra.mxu0 %v906
      %939 = vmatprep.subr.mxu0 0.0
      %940 = vmatpush1.msra.mxu0 %v905
      %941 = vmatprep.subr.mxu0 0.0
      %942 = vmatpush1.msra.mxu0 %v904
      %943 = vmatprep.subr.mxu0 0.0
      %944 = vmatpush1.msra.mxu0 %v903
      %945 = vmatprep.subr.mxu0 0.0
      %946 = vmatpush1.msra.mxu0 %v902
      %947 = vmatprep.subr.mxu0 0.0
      %948 = vmatpush1.msra.mxu0 %v901
      %949 = vmatprep.subr.mxu0 0.0
      %950 = vmatpush2.msra.mxu0 0.0
      %951 = vmatprep.subr.mxu0 0.0
      %952 = vmatpush2.msra.mxu0 0.0
      %953 = vmatprep.subr.mxu0 0.0
      %954 = vmatpush2.msra.mxu0 0.0
      %955 = vmatprep.subr.mxu0 0.0
      %956 = vmatpush2.msra.mxu0 0.0
      %957 = vmatprep.subr.mxu0 0.0
      %958 = vmatpush2.msra.mxu0 0.0
      %959 = vmatprep.subr.mxu0 0.0
      %960 = vmatpush2.msra.mxu0 0.0
      %961 = vmatprep.subr.mxu0 0.0
      %962 = vmatpush2.msra.mxu0 0.0
      %963 = vmatprep.subr.mxu0 0.0
      %964 = vmatpush2.msra.mxu0 0.0
      %965 = vmatprep.subr.mxu0 0.0
      %966 = vmatpush2.msra.mxu0 0.0
      %967 = vmatprep.subr.mxu0 0.0
      %968 = vmatpush2.msra.mxu0 0.0
      %969 = vmatprep.subr.mxu0 0.0
      %970 = vmatpush2.msra.mxu0 0.0
      %971 = vmatprep.subr.mxu0 0.0
      %972 = vmatpush2.msra.mxu0 0.0
      %973 = vmatprep.subr.mxu0 0.0
      %974 = vmatpush2.msra.mxu0 0.0
      %975 = vmatprep.subr.mxu0 0.0
      %976 = vmatpush2.msra.mxu0 0.0
      %977 = vmatprep.subr.mxu0 0.0
      %978 = vmatpush2.msra.mxu0 0.0
      %979 = vmatprep.subr.mxu0 0.0
      %980 = vmatpush2.msra.mxu0 0.0
      %981 = vmatprep.mubr.f32.mxu0 0.0
      %982 = vmatmul.mubr.f32.gmra.mxu0 %v567
      %v983 = vpop.f32.mrf.mxu0
      %v984 = vadd.f32 0.0, %v983
      %v985 = vpop.f32.mrf.mxu0
      %986 = vmatprep.mubr.f32.mxu0 0.0
      %987 = vmatmul.mubr.f32.gmra.mxu0 %v572
      %v988 = vpop.f32.mrf.mxu0
      %v989 = vadd.f32 0.0, %v988
      %v990 = vpop.f32.mrf.mxu0
      %991 = vmatprep.mubr.f32.mxu0 0.0
      %992 = vmatmul.mubr.f32.gmra.mxu0 %v577
      %v993 = vpop.f32.mrf.mxu0
      %v994 = vadd.f32 0.0, %v993
      %v995 = vpop.f32.mrf.mxu0
      %996 = vmatprep.mubr.f32.mxu0 0.0
      %997 = vmatmul.mubr.f32.gmra.mxu0 %v582
      %v998 = vpop.f32.mrf.mxu0
      %v999 = vadd.f32 0.0, %v998
      %v1000 = vpop.f32.mrf.mxu0
      %1001 = vmatprep.mubr.f32.mxu0 0.0
      %1002 = vmatmul.mubr.f32.gmra.mxu0 %v587
      %v1003 = vpop.f32.mrf.mxu0
      %v1004 = vadd.f32 0.0, %v1003
      %v1005 = vpop.f32.mrf.mxu0
      %1006 = vmatprep.mubr.f32.mxu0 0.0
      %1007 = vmatmul.mubr.f32.gmra.mxu0 %v592
      %v1008 = vpop.f32.mrf.mxu0
      %v1009 = vadd.f32 0.0, %v1008
      %v1010 = vpop.f32.mrf.mxu0
      %1011 = vmatprep.mubr.f32.mxu0 0.0
      %1012 = vmatmul.mubr.f32.gmra.mxu0 %v597
      %v1013 = vpop.f32.mrf.mxu0
      %v1014 = vadd.f32 0.0, %v1013
      %v1015 = vpop.f32.mrf.mxu0
      %1016 = vmatprep.mubr.f32.mxu0 0.0
      %1017 = vmatmul.mubr.f32.gmra.mxu0 %v602
      %v1018 = vpop.f32.mrf.mxu0
      %v1019 = vadd.f32 0.0, %v1018
      %v1020 = vpop.f32.mrf.mxu0
      %1021 = vmatprep.mubr.f32.mxu0 0.0
      %1022 = vmatmul.mubr.f32.gmra.mxu0 %v607
      %v1023 = vpop.f32.mrf.mxu0
      %v1024 = vadd.f32 0.0, %v1023
      %v1025 = vpop.f32.mrf.mxu0
      %1026 = vmatprep.mubr.f32.mxu0 0.0
      %1027 = vmatmul.mubr.f32.gmra.mxu0 %v612
      %v1028 = vpop.f32.mrf.mxu0
      %v1029 = vadd.f32 0.0, %v1028
      %v1030 = vpop.f32.mrf.mxu0
      %1031 = vmatprep.mubr.f32.mxu0 0.0
      %1032 = vmatmul.mubr.f32.gmra.mxu0 %v617
      %v1033 = vpop.f32.mrf.mxu0
      %v1034 = vadd.f32 0.0, %v1033
      %v1035 = vpop.f32.mrf.mxu0
      %1036 = vmatprep.mubr.f32.mxu0 0.0
      %1037 = vmatmul.mubr.f32.gmra.mxu0 %v622
      %v1038 = vpop.f32.mrf.mxu0
      %v1039 = vadd.f32 0.0, %v1038
      %v1040 = vpop.f32.mrf.mxu0
      %1041 = vmatprep.mubr.f32.mxu0 0.0
      %1042 = vmatmul.mubr.f32.gmra.mxu0 %v627
      %v1043 = vpop.f32.mrf.mxu0
      %v1044 = vadd.f32 0.0, %v1043
      %v1045 = vpop.f32.mrf.mxu0
      %1046 = vmatprep.mubr.f32.mxu0 0.0
      %1047 = vmatmul.mubr.f32.gmra.mxu0 %v632
      %v1048 = vpop.f32.mrf.mxu0
      %v1049 = vadd.f32 0.0, %v1048
      %v1050 = vpop.f32.mrf.mxu0
      %1051 = vmatprep.mubr.f32.mxu0 0.0
      %1052 = vmatmul.mubr.f32.gmra.mxu0 %v637
      %v1053 = vpop.f32.mrf.mxu0
      %v1054 = vadd.f32 0.0, %v1053
      %v1055 = vpop.f32.mrf.mxu0
      %1056 = vmatprep.mubr.f32.mxu0 0.0
      %1057 = vmatmul.mubr.f32.gmra.mxu0 %v642
      %v1058 = vpop.f32.mrf.mxu0
      %v1059 = vadd.f32 0.0, %v1058
      %v1060 = vpop.f32.mrf.mxu0
      %1061 = vdwg.mxu0
      %v1062 = vadd.f32 %v821, %v984
      %v1063 = vadd.f32 %v822, %v989
      %v1064 = vadd.f32 %v823, %v994
      %v1065 = vadd.f32 %v824, %v999
      %v1066 = vadd.f32 %v825, %v1004
      %v1067 = vadd.f32 %v826, %v1009
      %v1068 = vadd.f32 %v827, %v1014
      %v1069 = vadd.f32 %v828, %v1019
      %v1070 = vadd.f32 %v829, %v1024
      %v1071 = vadd.f32 %v830, %v1029
      %v1072 = vadd.f32 %v831, %v1034
      %v1073 = vadd.f32 %v832, %v1039
      %v1074 = vadd.f32 %v833, %v1044
      %v1075 = vadd.f32 %v834, %v1049
      %v1076 = vadd.f32 %v835, %v1054
      %v1077 = vadd.f32 %v836, %v1059
      %1078 = vmatprep.subr.mxu0 0.0
      %1079 = vmatpush1.msra.mxu0 %v1077
      %1080 = vmatprep.subr.mxu0 0.0
      %1081 = vmatpush1.msra.mxu0 %v1076
      %1082 = vmatprep.subr.mxu0 0.0
      %1083 = vmatpush1.msra.mxu0 %v1075
      %1084 = vmatprep.subr.mxu0 0.0
      %1085 = vmatpush1.msra.mxu0 %v1074
      %1086 = vmatprep.subr.mxu0 0.0
      %1087 = vmatpush1.msra.mxu0 %v1073
      %1088 = vmatprep.subr.mxu0 0.0
      %1089 = vmatpush1.msra.mxu0 %v1072
      %1090 = vmatprep.subr.mxu0 0.0
      %1091 = vmatpush1.msra.mxu0 %v1071
      %1092 = vmatprep.subr.mxu0 0.0
      %1093 = vmatpush1.msra.mxu0 %v1070
      %1094 = vmatprep.subr.mxu0 0.0
      %1095 = vmatpush1.msra.mxu0 %v1069
      %1096 = vmatprep.subr.mxu0 0.0
      %1097 = vmatpush1.msra.mxu0 %v1068
      %1098 = vmatprep.subr.mxu0 0.0
      %1099 = vmatpush1.msra.mxu0 %v1067
      %1100 = vmatprep.subr.mxu0 0.0
      %1101 = vmatpush1.msra.mxu0 %v1066
      %1102 = vmatprep.subr.mxu0 0.0
      %1103 = vmatpush1.msra.mxu0 %v1065
      %1104 = vmatprep.subr.mxu0 0.0
      %1105 = vmatpush1.msra.mxu0 %v1064
      %1106 = vmatprep.subr.mxu0 0.0
      %1107 = vmatpush1.msra.mxu0 %v1063
      %1108 = vmatprep.subr.mxu0 0.0
      %1109 = vmatpush1.msra.mxu0 %v1062
      %1110 = vmatprep.subr.mxu0 0.0
      %1111 = vmatpush2.msra.mxu0 0.0
      %1112 = vmatprep.subr.mxu0 0.0
      %1113 = vmatpush2.msra.mxu0 0.0
      %1114 = vmatprep.subr.mxu0 0.0
      %1115 = vmatpush2.msra.mxu0 0.0
      %1116 = vmatprep.subr.mxu0 0.0
      %1117 = vmatpush2.msra.mxu0 0.0
      %1118 = vmatprep.subr.mxu0 0.0
      %1119 = vmatpush2.msra.mxu0 0.0
      %1120 = vmatprep.subr.mxu0 0.0
      %1121 = vmatpush2.msra.mxu0 0.0
      %1122 = vmatprep.subr.mxu0 0.0
      %1123 = vmatpush2.msra.mxu0 0.0
      %1124 = vmatprep.subr.mxu0 0.0
      %1125 = vmatpush2.msra.mxu0 0.0
      %1126 = vmatprep.subr.mxu0 0.0
      %1127 = vmatpush2.msra.mxu0 0.0
      %1128 = vmatprep.subr.mxu0 0.0
      %1129 = vmatpush2.msra.mxu0 0.0
      %1130 = vmatprep.subr.mxu0 0.0
      %1131 = vmatpush2.msra.mxu0 0.0
      %1132 = vmatprep.subr.mxu0 0.0
      %1133 = vmatpush2.msra.mxu0 0.0
      %1134 = vmatprep.subr.mxu0 0.0
      %1135 = vmatpush2.msra.mxu0 0.0
      %1136 = vmatprep.subr.mxu0 0.0
      %1137 = vmatpush2.msra.mxu0 0.0
      %1138 = vmatprep.subr.mxu0 0.0
      %1139 = vmatpush2.msra.mxu0 0.0
      %1140 = vmatprep.subr.mxu0 0.0
      %1141 = vmatpush2.msra.mxu0 0.0
      %1142 = vmatprep.mubr.f32.mxu0 0.0
      %1143 = vmatmul.mubr.f32.gmra.mxu0 %v567
      %v1144 = vpop.f32.mrf.mxu0
      %v1145 = vadd.f32 0.0, %v1144
      %v1146 = vpop.f32.mrf.mxu0
      %1147 = vmatprep.mubr.f32.mxu0 0.0
      %1148 = vmatmul.mubr.f32.gmra.mxu0 %v572
      %v1149 = vpop.f32.mrf.mxu0
      %v1150 = vadd.f32 0.0, %v1149
      %v1151 = vpop.f32.mrf.mxu0
      %1152 = vmatprep.mubr.f32.mxu0 0.0
      %1153 = vmatmul.mubr.f32.gmra.mxu0 %v577
      %v1154 = vpop.f32.mrf.mxu0
      %v1155 = vadd.f32 0.0, %v1154
      %v1156 = vpop.f32.mrf.mxu0
      %1157 = vmatprep.mubr.f32.mxu0 0.0
      %1158 = vmatmul.mubr.f32.gmra.mxu0 %v582
      %v1159 = vpop.f32.mrf.mxu0
      %v1160 = vadd.f32 0.0, %v1159
      %v1161 = vpop.f32.mrf.mxu0
      %1162 = vmatprep.mubr.f32.mxu0 0.0
      %1163 = vmatmul.mubr.f32.gmra.mxu0 %v587
      %v1164 = vpop.f32.mrf.mxu0
      %v1165 = vadd.f32 0.0, %v1164
      %v1166 = vpop.f32.mrf.mxu0
      %1167 = vmatprep.mubr.f32.mxu0 0.0
      %1168 = vmatmul.mubr.f32.gmra.mxu0 %v592
      %v1169 = vpop.f32.mrf.mxu0
      %v1170 = vadd.f32 0.0, %v1169
      %v1171 = vpop.f32.mrf.mxu0
      %1172 = vmatprep.mubr.f32.mxu0 0.0
      %1173 = vmatmul.mubr.f32.gmra.mxu0 %v597
      %v1174 = vpop.f32.mrf.mxu0
      %v1175 = vadd.f32 0.0, %v1174
      %v1176 = vpop.f32.mrf.mxu0
      %1177 = vmatprep.mubr.f32.mxu0 0.0
      %1178 = vmatmul.mubr.f32.gmra.mxu0 %v602
      %v1179 = vpop.f32.mrf.mxu0
      %v1180 = vadd.f32 0.0, %v1179
      %v1181 = vpop.f32.mrf.mxu0
      %1182 = vmatprep.mubr.f32.mxu0 0.0
      %1183 = vmatmul.mubr.f32.gmra.mxu0 %v607
      %v1184 = vpop.f32.mrf.mxu0
      %v1185 = vadd.f32 0.0, %v1184
      %v1186 = vpop.f32.mrf.mxu0
      %1187 = vmatprep.mubr.f32.mxu0 0.0
      %1188 = vmatmul.mubr.f32.gmra.mxu0 %v612
      %v1189 = vpop.f32.mrf.mxu0
      %v1190 = vadd.f32 0.0, %v1189
      %v1191 = vpop.f32.mrf.mxu0
      %1192 = vmatprep.mubr.f32.mxu0 0.0
      %1193 = vmatmul.mubr.f32.gmra.mxu0 %v617
      %v1194 = vpop.f32.mrf.mxu0
      %v1195 = vadd.f32 0.0, %v1194
      %v1196 = vpop.f32.mrf.mxu0
      %1197 = vmatprep.mubr.f32.mxu0 0.0
      %1198 = vmatmul.mubr.f32.gmra.mxu0 %v622
      %v1199 = vpop.f32.mrf.mxu0
      %v1200 = vadd.f32 0.0, %v1199
      %v1201 = vpop.f32.mrf.mxu0
      %1202 = vmatprep.mubr.f32.mxu0 0.0
      %1203 = vmatmul.mubr.f32.gmra.mxu0 %v627
      %v1204 = vpop.f32.mrf.mxu0
      %v1205 = vadd.f32 0.0, %v1204
      %v1206 = vpop.f32.mrf.mxu0
      %1207 = vmatprep.mubr.f32.mxu0 0.0
      %1208 = vmatmul.mubr.f32.gmra.mxu0 %v632
      %v1209 = vpop.f32.mrf.mxu0
      %v1210 = vadd.f32 0.0, %v1209
      %v1211 = vpop.f32.mrf.mxu0
      %1212 = vmatprep.mubr.f32.mxu0 0.0
      %1213 = vmatmul.mubr.f32.gmra.mxu0 %v637
      %v1214 = vpop.f32.mrf.mxu0
      %v1215 = vadd.f32 0.0, %v1214
      %v1216 = vpop.f32.mrf.mxu0
      %1217 = vmatprep.mubr.f32.mxu0 0.0
      %1218 = vmatmul.mubr.f32.gmra.mxu0 %v642
      %v1219 = vpop.f32.mrf.mxu0
      %v1220 = vadd.f32 0.0, %v1219
      %v1221 = vpop.f32.mrf.mxu0
      %1222 = vdwg.mxu0
      %v1223 = vadd.f32 %v709, %v1145
      %v1224 = vadd.f32 %v710, %v1150
      %v1225 = vadd.f32 %v711, %v1155
      %v1226 = vadd.f32 %v712, %v1160
      %v1227 = vadd.f32 %v713, %v1165
      %v1228 = vadd.f32 %v714, %v1170
      %v1229 = vadd.f32 %v715, %v1175
      %v1230 = vadd.f32 %v716, %v1180
      %v1231 = vadd.f32 %v717, %v1185
      %v1232 = vadd.f32 %v718, %v1190
      %v1233 = vadd.f32 %v719, %v1195
      %v1234 = vadd.f32 %v720, %v1200
      %v1235 = vadd.f32 %v721, %v1205
      %v1236 = vadd.f32 %v722, %v1210
      %v1237 = vadd.f32 %v723, %v1215
      %v1238 = vadd.f32 %v724, %v1220
      %1239 = vmatprep.subr.mxu0 0.0
      %1240 = vmatpush1.msra.mxu0 %v1238
      %1241 = vmatprep.subr.mxu0 0.0
      %1242 = vmatpush1.msra.mxu0 %v1237
      %1243 = vmatprep.subr.mxu0 0.0
      %1244 = vmatpush1.msra.mxu0 %v1236
      %1245 = vmatprep.subr.mxu0 0.0
      %1246 = vmatpush1.msra.mxu0 %v1235
      %1247 = vmatprep.subr.mxu0 0.0
      %1248 = vmatpush1.msra.mxu0 %v1234
      %1249 = vmatprep.subr.mxu0 0.0
      %1250 = vmatpush1.msra.mxu0 %v1233
      %1251 = vmatprep.subr.mxu0 0.0
      %1252 = vmatpush1.msra.mxu0 %v1232
      %1253 = vmatprep.subr.mxu0 0.0
      %1254 = vmatpush1.msra.mxu0 %v1231
      %1255 = vmatprep.subr.mxu0 0.0
      %1256 = vmatpush1.msra.mxu0 %v1230
      %1257 = vmatprep.subr.mxu0 0.0
      %1258 = vmatpush1.msra.mxu0 %v1229
      %1259 = vmatprep.subr.mxu0 0.0
      %1260 = vmatpush1.msra.mxu0 %v1228
      %1261 = vmatprep.subr.mxu0 0.0
      %1262 = vmatpush1.msra.mxu0 %v1227
      %1263 = vmatprep.subr.mxu0 0.0
      %1264 = vmatpush1.msra.mxu0 %v1226
      %1265 = vmatprep.subr.mxu0 0.0
      %1266 = vmatpush1.msra.mxu0 %v1225
      %1267 = vmatprep.subr.mxu0 0.0
      %1268 = vmatpush1.msra.mxu0 %v1224
      %1269 = vmatprep.subr.mxu0 0.0
      %1270 = vmatpush1.msra.mxu0 %v1223
      %1271 = vmatprep.subr.mxu0 0.0
      %1272 = vmatpush2.msra.mxu0 0.0
      %1273 = vmatprep.subr.mxu0 0.0
      %1274 = vmatpush2.msra.mxu0 0.0
      %1275 = vmatprep.subr.mxu0 0.0
      %1276 = vmatpush2.msra.mxu0 0.0
      %1277 = vmatprep.subr.mxu0 0.0
      %1278 = vmatpush2.msra.mxu0 0.0
      %1279 = vmatprep.subr.mxu0 0.0
      %1280 = vmatpush2.msra.mxu0 0.0
      %1281 = vmatprep.subr.mxu0 0.0
      %1282 = vmatpush2.msra.mxu0 0.0
      %1283 = vmatprep.subr.mxu0 0.0
      %1284 = vmatpush2.msra.mxu0 0.0
      %1285 = vmatprep.subr.mxu0 0.0
      %1286 = vmatpush2.msra.mxu0 0.0
      %1287 = vmatprep.subr.mxu0 0.0
      %1288 = vmatpush2.msra.mxu0 0.0
      %1289 = vmatprep.subr.mxu0 0.0
      %1290 = vmatpush2.msra.mxu0 0.0
      %1291 = vmatprep.subr.mxu0 0.0
      %1292 = vmatpush2.msra.mxu0 0.0
      %1293 = vmatprep.subr.mxu0 0.0
      %1294 = vmatpush2.msra.mxu0 0.0
      %1295 = vmatprep.subr.mxu0 0.0
      %1296 = vmatpush2.msra.mxu0 0.0
      %1297 = vmatprep.subr.mxu0 0.0
      %1298 = vmatpush2.msra.mxu0 0.0
      %1299 = vmatprep.subr.mxu0 0.0
      %1300 = vmatpush2.msra.mxu0 0.0
      %1301 = vmatprep.subr.mxu0 0.0
      %1302 = vmatpush2.msra.mxu0 0.0
      %1303 = vmatprep.mubr.f32.mxu0 0.0
      %1304 = vmatmul.mubr.f32.gmra.mxu0 %v1223
      %v1305 = vpop.f32.mrf.mxu0
      %v1306 = vadd.f32 0.0, %v1305
      %v1307 = vpop.f32.mrf.mxu0
      %1308 = vmatprep.mubr.f32.mxu0 0.0
      %1309 = vmatmul.mubr.f32.gmra.mxu0 %v1224
      %v1310 = vpop.f32.mrf.mxu0
      %v1311 = vadd.f32 0.0, %v1310
      %v1312 = vpop.f32.mrf.mxu0
      %1313 = vmatprep.mubr.f32.mxu0 0.0
      %1314 = vmatmul.mubr.f32.gmra.mxu0 %v1225
      %v1315 = vpop.f32.mrf.mxu0
      %v1316 = vadd.f32 0.0, %v1315
      %v1317 = vpop.f32.mrf.mxu0
      %1318 = vmatprep.mubr.f32.mxu0 0.0
      %1319 = vmatmul.mubr.f32.gmra.mxu0 %v1226
      %v1320 = vpop.f32.mrf.mxu0
      %v1321 = vadd.f32 0.0, %v1320
      %v1322 = vpop.f32.mrf.mxu0
      %1323 = vmatprep.mubr.f32.mxu0 0.0
      %1324 = vmatmul.mubr.f32.gmra.mxu0 %v1227
      %v1325 = vpop.f32.mrf.mxu0
      %v1326 = vadd.f32 0.0, %v1325
      %v1327 = vpop.f32.mrf.mxu0
      %1328 = vmatprep.mubr.f32.mxu0 0.0
      %1329 = vmatmul.mubr.f32.gmra.mxu0 %v1228
      %v1330 = vpop.f32.mrf.mxu0
      %v1331 = vadd.f32 0.0, %v1330
      %v1332 = vpop.f32.mrf.mxu0
      %1333 = vmatprep.mubr.f32.mxu0 0.0
      %1334 = vmatmul.mubr.f32.gmra.mxu0 %v1229
      %v1335 = vpop.f32.mrf.mxu0
      %v1336 = vadd.f32 0.0, %v1335
      %v1337 = vpop.f32.mrf.mxu0
      %1338 = vmatprep.mubr.f32.mxu0 0.0
      %1339 = vmatmul.mubr.f32.gmra.mxu0 %v1230
      %v1340 = vpop.f32.mrf.mxu0
      %v1341 = vadd.f32 0.0, %v1340
      %v1342 = vpop.f32.mrf.mxu0
      %1343 = vmatprep.mubr.f32.mxu0 0.0
      %1344 = vmatmul.mubr.f32.gmra.mxu0 %v1231
      %v1345 = vpop.f32.mrf.mxu0
      %v1346 = vadd.f32 0.0, %v1345
      %v1347 = vpop.f32.mrf.mxu0
      %1348 = vmatprep.mubr.f32.mxu0 0.0
      %1349 = vmatmul.mubr.f32.gmra.mxu0 %v1232
      %v1350 = vpop.f32.mrf.mxu0
      %v1351 = vadd.f32 0.0, %v1350
      %v1352 = vpop.f32.mrf.mxu0
      %1353 = vmatprep.mubr.f32.mxu0 0.0
      %1354 = vmatmul.mubr.f32.gmra.mxu0 %v1233
      %v1355 = vpop.f32.mrf.mxu0
      %v1356 = vadd.f32 0.0, %v1355
      %v1357 = vpop.f32.mrf.mxu0
      %1358 = vmatprep.mubr.f32.mxu0 0.0
      %1359 = vmatmul.mubr.f32.gmra.mxu0 %v1234
      %v1360 = vpop.f32.mrf.mxu0
      %v1361 = vadd.f32 0.0, %v1360
      %v1362 = vpop.f32.mrf.mxu0
      %1363 = vmatprep.mubr.f32.mxu0 0.0
      %1364 = vmatmul.mubr.f32.gmra.mxu0 %v1235
      %v1365 = vpop.f32.mrf.mxu0
      %v1366 = vadd.f32 0.0, %v1365
      %v1367 = vpop.f32.mrf.mxu0
      %1368 = vmatprep.mubr.f32.mxu0 0.0
      %1369 = vmatmul.mubr.f32.gmra.mxu0 %v1236
      %v1370 = vpop.f32.mrf.mxu0
      %v1371 = vadd.f32 0.0, %v1370
      %v1372 = vpop.f32.mrf.mxu0
      %1373 = vmatprep.mubr.f32.mxu0 0.0
      %1374 = vmatmul.mubr.f32.gmra.mxu0 %v1237
      %v1375 = vpop.f32.mrf.mxu0
      %v1376 = vadd.f32 0.0, %v1375
      %v1377 = vpop.f32.mrf.mxu0
      %1378 = vmatprep.mubr.f32.mxu0 0.0
      %1379 = vmatmul.mubr.f32.gmra.mxu0 %v1238
      %v1380 = vpop.f32.mrf.mxu0
      %v1381 = vadd.f32 0.0, %v1380
      %v1382 = vpop.f32.mrf.mxu0
      %1383 = vdwg.mxu0
      %1384 = vmatprep.subr.mxu0 0.0
      %1385 = vmatpush1.msra.mxu0 %v1381
      %1386 = vmatprep.subr.mxu0 0.0
      %1387 = vmatpush1.msra.mxu0 %v1376
      %1388 = vmatprep.subr.mxu0 0.0
      %1389 = vmatpush1.msra.mxu0 %v1371
      %1390 = vmatprep.subr.mxu0 0.0
      %1391 = vmatpush1.msra.mxu0 %v1366
      %1392 = vmatprep.subr.mxu0 0.0
      %1393 = vmatpush1.msra.mxu0 %v1361
      %1394 = vmatprep.subr.mxu0 0.0
      %1395 = vmatpush1.msra.mxu0 %v1356
      %1396 = vmatprep.subr.mxu0 0.0
      %1397 = vmatpush1.msra.mxu0 %v1351
      %1398 = vmatprep.subr.mxu0 0.0
      %1399 = vmatpush1.msra.mxu0 %v1346
      %1400 = vmatprep.subr.mxu0 0.0
      %1401 = vmatpush1.msra.mxu0 %v1341
      %1402 = vmatprep.subr.mxu0 0.0
      %1403 = vmatpush1.msra.mxu0 %v1336
      %1404 = vmatprep.subr.mxu0 0.0
      %1405 = vmatpush1.msra.mxu0 %v1331
      %1406 = vmatprep.subr.mxu0 0.0
      %1407 = vmatpush1.msra.mxu0 %v1326
      %1408 = vmatprep.subr.mxu0 0.0
      %1409 = vmatpush1.msra.mxu0 %v1321
      %1410 = vmatprep.subr.mxu0 0.0
      %1411 = vmatpush1.msra.mxu0 %v1316
      %1412 = vmatprep.subr.mxu0 0.0
      %1413 = vmatpush1.msra.mxu0 %v1311
      %1414 = vmatprep.subr.mxu0 0.0
      %1415 = vmatpush1.msra.mxu0 %v1306
      %1416 = vmatprep.subr.mxu0 0.0
      %1417 = vmatpush2.msra.mxu0 0.0
      %1418 = vmatprep.subr.mxu0 0.0
      %1419 = vmatpush2.msra.mxu0 0.0
      %1420 = vmatprep.subr.mxu0 0.0
      %1421 = vmatpush2.msra.mxu0 0.0
      %1422 = vmatprep.subr.mxu0 0.0
      %1423 = vmatpush2.msra.mxu0 0.0
      %1424 = vmatprep.subr.mxu0 0.0
      %1425 = vmatpush2.msra.mxu0 0.0
      %1426 = vmatprep.subr.mxu0 0.0
      %1427 = vmatpush2.msra.mxu0 0.0
      %1428 = vmatprep.subr.mxu0 0.0
      %1429 = vmatpush2.msra.mxu0 0.0
      %1430 = vmatprep.subr.mxu0 0.0
      %1431 = vmatpush2.msra.mxu0 0.0
      %1432 = vmatprep.subr.mxu0 0.0
      %1433 = vmatpush2.msra.mxu0 0.0
      %1434 = vmatprep.subr.mxu0 0.0
      %1435 = vmatpush2.msra.mxu0 0.0
      %1436 = vmatprep.subr.mxu0 0.0
      %1437 = vmatpush2.msra.mxu0 0.0
      %1438 = vmatprep.subr.mxu0 0.0
      %1439 = vmatpush2.msra.mxu0 0.0
      %1440 = vmatprep.subr.mxu0 0.0
      %1441 = vmatpush2.msra.mxu0 0.0
      %1442 = vmatprep.subr.mxu0 0.0
      %1443 = vmatpush2.msra.mxu0 0.0
      %1444 = vmatprep.subr.mxu0 0.0
      %1445 = vmatpush2.msra.mxu0 0.0
      %1446 = vmatprep.subr.mxu0 0.0
      %1447 = vmatpush2.msra.mxu0 0.0
      %1448 = vmatprep.mubr.f32.mxu0 0.0
      %1449 = vmatmul.mubr.f32.gmra.mxu0 %v1306
      %v1450 = vpop.f32.mrf.mxu0
      %v1451 = vadd.f32 0.0, %v1450
      %v1452 = vpop.f32.mrf.mxu0
      %1453 = vmatprep.mubr.f32.mxu0 0.0
      %1454 = vmatmul.mubr.f32.gmra.mxu0 %v1311
      %v1455 = vpop.f32.mrf.mxu0
      %v1456 = vadd.f32 0.0, %v1455
      %v1457 = vpop.f32.mrf.mxu0
      %1458 = vmatprep.mubr.f32.mxu0 0.0
      %1459 = vmatmul.mubr.f32.gmra.mxu0 %v1316
      %v1460 = vpop.f32.mrf.mxu0
      %v1461 = vadd.f32 0.0, %v1460
      %v1462 = vpop.f32.mrf.mxu0
      %1463 = vmatprep.mubr.f32.mxu0 0.0
      %1464 = vmatmul.mubr.f32.gmra.mxu0 %v1321
      %v1465 = vpop.f32.mrf.mxu0
      %v1466 = vadd.f32 0.0, %v1465
      %v1467 = vpop.f32.mrf.mxu0
      %1468 = vmatprep.mubr.f32.mxu0 0.0
      %1469 = vmatmul.mubr.f32.gmra.mxu0 %v1326
      %v1470 = vpop.f32.mrf.mxu0
      %v1471 = vadd.f32 0.0, %v1470
      %v1472 = vpop.f32.mrf.mxu0
      %1473 = vmatprep.mubr.f32.mxu0 0.0
      %1474 = vmatmul.mubr.f32.gmra.mxu0 %v1331
      %v1475 = vpop.f32.mrf.mxu0
      %v1476 = vadd.f32 0.0, %v1475
      %v1477 = vpop.f32.mrf.mxu0
      %1478 = vmatprep.mubr.f32.mxu0 0.0
      %1479 = vmatmul.mubr.f32.gmra.mxu0 %v1336
      %v1480 = vpop.f32.mrf.mxu0
      %v1481 = vadd.f32 0.0, %v1480
      %v1482 = vpop.f32.mrf.mxu0
      %1483 = vmatprep.mubr.f32.mxu0 0.0
      %1484 = vmatmul.mubr.f32.gmra.mxu0 %v1341
      %v1485 = vpop.f32.mrf.mxu0
      %v1486 = vadd.f32 0.0, %v1485
      %v1487 = vpop.f32.mrf.mxu0
      %1488 = vmatprep.mubr.f32.mxu0 0.0
      %1489 = vmatmul.mubr.f32.gmra.mxu0 %v1346
      %v1490 = vpop.f32.mrf.mxu0
      %v1491 = vadd.f32 0.0, %v1490
      %v1492 = vpop.f32.mrf.mxu0
      %1493 = vmatprep.mubr.f32.mxu0 0.0
      %1494 = vmatmul.mubr.f32.gmra.mxu0 %v1351
      %v1495 = vpop.f32.mrf.mxu0
      %v1496 = vadd.f32 0.0, %v1495
      %v1497 = vpop.f32.mrf.mxu0
      %1498 = vmatprep.mubr.f32.mxu0 0.0
      %1499 = vmatmul.mubr.f32.gmra.mxu0 %v1356
      %v1500 = vpop.f32.mrf.mxu0
      %v1501 = vadd.f32 0.0, %v1500
      %v1502 = vpop.f32.mrf.mxu0
      %1503 = vmatprep.mubr.f32.mxu0 0.0
      %1504 = vmatmul.mubr.f32.gmra.mxu0 %v1361
      %v1505 = vpop.f32.mrf.mxu0
      %v1506 = vadd.f32 0.0, %v1505
      %v1507 = vpop.f32.mrf.mxu0
      %1508 = vmatprep.mubr.f32.mxu0 0.0
      %1509 = vmatmul.mubr.f32.gmra.mxu0 %v1366
      %v1510 = vpop.f32.mrf.mxu0
      %v1511 = vadd.f32 0.0, %v1510
      %v1512 = vpop.f32.mrf.mxu0
      %1513 = vmatprep.mubr.f32.mxu0 0.0
      %1514 = vmatmul.mubr.f32.gmra.mxu0 %v1371
      %v1515 = vpop.f32.mrf.mxu0
      %v1516 = vadd.f32 0.0, %v1515
      %v1517 = vpop.f32.mrf.mxu0
      %1518 = vmatprep.mubr.f32.mxu0 0.0
      %1519 = vmatmul.mubr.f32.gmra.mxu0 %v1376
      %v1520 = vpop.f32.mrf.mxu0
      %v1521 = vadd.f32 0.0, %v1520
      %v1522 = vpop.f32.mrf.mxu0
      %1523 = vmatprep.mubr.f32.mxu0 0.0
      %1524 = vmatmul.mubr.f32.gmra.mxu0 %v1381
      %v1525 = vpop.f32.mrf.mxu0
      %v1526 = vadd.f32 0.0, %v1525
      %v1527 = vpop.f32.mrf.mxu0
      %1528 = vdwg.mxu0
      %1529 = vmatprep.subr.mxu0 0.0
      %1530 = vmatpush1.msra.mxu0 %v1526
      %1531 = vmatprep.subr.mxu0 0.0
      %1532 = vmatpush1.msra.mxu0 %v1521
      %1533 = vmatprep.subr.mxu0 0.0
      %1534 = vmatpush1.msra.mxu0 %v1516
      %1535 = vmatprep.subr.mxu0 0.0
      %1536 = vmatpush1.msra.mxu0 %v1511
      %1537 = vmatprep.subr.mxu0 0.0
      %1538 = vmatpush1.msra.mxu0 %v1506
      %1539 = vmatprep.subr.mxu0 0.0
      %1540 = vmatpush1.msra.mxu0 %v1501
      %1541 = vmatprep.subr.mxu0 0.0
      %1542 = vmatpush1.msra.mxu0 %v1496
      %1543 = vmatprep.subr.mxu0 0.0
      %1544 = vmatpush1.msra.mxu0 %v1491
      %1545 = vmatprep.subr.mxu0 0.0
      %1546 = vmatpush1.msra.mxu0 %v1486
      %1547 = vmatprep.subr.mxu0 0.0
      %1548 = vmatpush1.msra.mxu0 %v1481
      %1549 = vmatprep.subr.mxu0 0.0
      %1550 = vmatpush1.msra.mxu0 %v1476
      %1551 = vmatprep.subr.mxu0 0.0
      %1552 = vmatpush1.msra.mxu0 %v1471
      %1553 = vmatprep.subr.mxu0 0.0
      %1554 = vmatpush1.msra.mxu0 %v1466
      %1555 = vmatprep.subr.mxu0 0.0
      %1556 = vmatpush1.msra.mxu0 %v1461
      %1557 = vmatprep.subr.mxu0 0.0
      %1558 = vmatpush1.msra.mxu0 %v1456
      %1559 = vmatprep.subr.mxu0 0.0
      %1560 = vmatpush1.msra.mxu0 %v1451
      %1561 = vmatprep.subr.mxu0 0.0
      %1562 = vmatpush2.msra.mxu0 0.0
      %1563 = vmatprep.subr.mxu0 0.0
      %1564 = vmatpush2.msra.mxu0 0.0
      %1565 = vmatprep.subr.mxu0 0.0
      %1566 = vmatpush2.msra.mxu0 0.0
      %1567 = vmatprep.subr.mxu0 0.0
      %1568 = vmatpush2.msra.mxu0 0.0
      %1569 = vmatprep.subr.mxu0 0.0
      %1570 = vmatpush2.msra.mxu0 0.0
      %1571 = vmatprep.subr.mxu0 0.0
      %1572 = vmatpush2.msra.mxu0 0.0
      %1573 = vmatprep.subr.mxu0 0.0
      %1574 = vmatpush2.msra.mxu0 0.0
      %1575 = vmatprep.subr.mxu0 0.0
      %1576 = vmatpush2.msra.mxu0 0.0
      %1577 = vmatprep.subr.mxu0 0.0
      %1578 = vmatpush2.msra.mxu0 0.0
      %1579 = vmatprep.subr.mxu0 0.0
      %1580 = vmatpush2.msra.mxu0 0.0
      %1581 = vmatprep.subr.mxu0 0.0
      %1582 = vmatpush2.msra.mxu0 0.0
      %1583 = vmatprep.subr.mxu0 0.0
      %1584 = vmatpush2.msra.mxu0 0.0
      %1585 = vmatprep.subr.mxu0 0.0
      %1586 = vmatpush2.msra.mxu0 0.0
      %1587 = vmatprep.subr.mxu0 0.0
      %1588 = vmatpush2.msra.mxu0 0.0
      %1589 = vmatprep.subr.mxu0 0.0
      %1590 = vmatpush2.msra.mxu0 0.0
      %1591 = vmatprep.subr.mxu0 0.0
      %1592 = vmatpush2.msra.mxu0 0.0
      %1593 = vmatprep.mubr.f32.mxu0 0.0
      %1594 = vmatmul.mubr.f32.gmra.mxu0 %v1451
      %v1595 = vpop.f32.mrf.mxu0
      %v1596 = vadd.f32 0.0, %v1595
      %v1597 = vpop.f32.mrf.mxu0
      %1598 = vmatprep.mubr.f32.mxu0 0.0
      %1599 = vmatmul.mubr.f32.gmra.mxu0 %v1456
      %v1600 = vpop.f32.mrf.mxu0
      %v1601 = vadd.f32 0.0, %v1600
      %v1602 = vpop.f32.mrf.mxu0
      %1603 = vmatprep.mubr.f32.mxu0 0.0
      %1604 = vmatmul.mubr.f32.gmra.mxu0 %v1461
      %v1605 = vpop.f32.mrf.mxu0
      %v1606 = vadd.f32 0.0, %v1605
      %v1607 = vpop.f32.mrf.mxu0
      %1608 = vmatprep.mubr.f32.mxu0 0.0
      %1609 = vmatmul.mubr.f32.gmra.mxu0 %v1466
      %v1610 = vpop.f32.mrf.mxu0
      %v1611 = vadd.f32 0.0, %v1610
      %v1612 = vpop.f32.mrf.mxu0
      %1613 = vmatprep.mubr.f32.mxu0 0.0
      %1614 = vmatmul.mubr.f32.gmra.mxu0 %v1471
      %v1615 = vpop.f32.mrf.mxu0
      %v1616 = vadd.f32 0.0, %v1615
      %v1617 = vpop.f32.mrf.mxu0
      %1618 = vmatprep.mubr.f32.mxu0 0.0
      %1619 = vmatmul.mubr.f32.gmra.mxu0 %v1476
      %v1620 = vpop.f32.mrf.mxu0
      %v1621 = vadd.f32 0.0, %v1620
      %v1622 = vpop.f32.mrf.mxu0
      %1623 = vmatprep.mubr.f32.mxu0 0.0
      %1624 = vmatmul.mubr.f32.gmra.mxu0 %v1481
      %v1625 = vpop.f32.mrf.mxu0
      %v1626 = vadd.f32 0.0, %v1625
      %v1627 = vpop.f32.mrf.mxu0
      %1628 = vmatprep.mubr.f32.mxu0 0.0
      %1629 = vmatmul.mubr.f32.gmra.mxu0 %v1486
      %v1630 = vpop.f32.mrf.mxu0
      %v1631 = vadd.f32 0.0, %v1630
      %v1632 = vpop.f32.mrf.mxu0
      %1633 = vmatprep.mubr.f32.mxu0 0.0
      %1634 = vmatmul.mubr.f32.gmra.mxu0 %v1491
      %v1635 = vpop.f32.mrf.mxu0
      %v1636 = vadd.f32 0.0, %v1635
      %v1637 = vpop.f32.mrf.mxu0
      %1638 = vmatprep.mubr.f32.mxu0 0.0
      %1639 = vmatmul.mubr.f32.gmra.mxu0 %v1496
      %v1640 = vpop.f32.mrf.mxu0
      %v1641 = vadd.f32 0.0, %v1640
      %v1642 = vpop.f32.mrf.mxu0
      %1643 = vmatprep.mubr.f32.mxu0 0.0
      %1644 = vmatmul.mubr.f32.gmra.mxu0 %v1501
      %v1645 = vpop.f32.mrf.mxu0
      %v1646 = vadd.f32 0.0, %v1645
      %v1647 = vpop.f32.mrf.mxu0
      %1648 = vmatprep.mubr.f32.mxu0 0.0
      %1649 = vmatmul.mubr.f32.gmra.mxu0 %v1506
      %v1650 = vpop.f32.mrf.mxu0
      %v1651 = vadd.f32 0.0, %v1650
      %v1652 = vpop.f32.mrf.mxu0
      %1653 = vmatprep.mubr.f32.mxu0 0.0
      %1654 = vmatmul.mubr.f32.gmra.mxu0 %v1511
      %v1655 = vpop.f32.mrf.mxu0
      %v1656 = vadd.f32 0.0, %v1655
      %v1657 = vpop.f32.mrf.mxu0
      %1658 = vmatprep.mubr.f32.mxu0 0.0
      %1659 = vmatmul.mubr.f32.gmra.mxu0 %v1516
      %v1660 = vpop.f32.mrf.mxu0
      %v1661 = vadd.f32 0.0, %v1660
      %v1662 = vpop.f32.mrf.mxu0
      %1663 = vmatprep.mubr.f32.mxu0 0.0
      %1664 = vmatmul.mubr.f32.gmra.mxu0 %v1521
      %v1665 = vpop.f32.mrf.mxu0
      %v1666 = vadd.f32 0.0, %v1665
      %v1667 = vpop.f32.mrf.mxu0
      %1668 = vmatprep.mubr.f32.mxu0 0.0
      %1669 = vmatmul.mubr.f32.gmra.mxu0 %v1526
      %v1670 = vpop.f32.mrf.mxu0
      %v1671 = vadd.f32 0.0, %v1670
      %v1672 = vpop.f32.mrf.mxu0
      %1673 = vdwg.mxu0
      %1674 = vmatprep.subr.mxu0 0.0
      %1675 = vmatpush1.msra.mxu0 %v1671
      %1676 = vmatprep.subr.mxu0 0.0
      %1677 = vmatpush1.msra.mxu0 %v1666
      %1678 = vmatprep.subr.mxu0 0.0
      %1679 = vmatpush1.msra.mxu0 %v1661
      %1680 = vmatprep.subr.mxu0 0.0
      %1681 = vmatpush1.msra.mxu0 %v1656
      %1682 = vmatprep.subr.mxu0 0.0
      %1683 = vmatpush1.msra.mxu0 %v1651
      %1684 = vmatprep.subr.mxu0 0.0
      %1685 = vmatpush1.msra.mxu0 %v1646
      %1686 = vmatprep.subr.mxu0 0.0
      %1687 = vmatpush1.msra.mxu0 %v1641
      %1688 = vmatprep.subr.mxu0 0.0
      %1689 = vmatpush1.msra.mxu0 %v1636
      %1690 = vmatprep.subr.mxu0 0.0
      %1691 = vmatpush1.msra.mxu0 %v1631
      %1692 = vmatprep.subr.mxu0 0.0
      %1693 = vmatpush1.msra.mxu0 %v1626
      %1694 = vmatprep.subr.mxu0 0.0
      %1695 = vmatpush1.msra.mxu0 %v1621
      %1696 = vmatprep.subr.mxu0 0.0
      %1697 = vmatpush1.msra.mxu0 %v1616
      %1698 = vmatprep.subr.mxu0 0.0
      %1699 = vmatpush1.msra.mxu0 %v1611
      %1700 = vmatprep.subr.mxu0 0.0
      %1701 = vmatpush1.msra.mxu0 %v1606
      %1702 = vmatprep.subr.mxu0 0.0
      %1703 = vmatpush1.msra.mxu0 %v1601
      %1704 = vmatprep.subr.mxu0 0.0
      %1705 = vmatpush1.msra.mxu0 %v1596
      %1706 = vmatprep.subr.mxu0 0.0
      %1707 = vmatpush2.msra.mxu0 0.0
      %1708 = vmatprep.subr.mxu0 0.0
      %1709 = vmatpush2.msra.mxu0 0.0
      %1710 = vmatprep.subr.mxu0 0.0
      %1711 = vmatpush2.msra.mxu0 0.0
      %1712 = vmatprep.subr.mxu0 0.0
      %1713 = vmatpush2.msra.mxu0 0.0
      %1714 = vmatprep.subr.mxu0 0.0
      %1715 = vmatpush2.msra.mxu0 0.0
      %1716 = vmatprep.subr.mxu0 0.0
      %1717 = vmatpush2.msra.mxu0 0.0
      %1718 = vmatprep.subr.mxu0 0.0
      %1719 = vmatpush2.msra.mxu0 0.0
      %1720 = vmatprep.subr.mxu0 0.0
      %1721 = vmatpush2.msra.mxu0 0.0
      %1722 = vmatprep.subr.mxu0 0.0
      %1723 = vmatpush2.msra.mxu0 0.0
      %1724 = vmatprep.subr.mxu0 0.0
      %1725 = vmatpush2.msra.mxu0 0.0
      %1726 = vmatprep.subr.mxu0 0.0
      %1727 = vmatpush2.msra.mxu0 0.0
      %1728 = vmatprep.subr.mxu0 0.0
      %1729 = vmatpush2.msra.mxu0 0.0
      %1730 = vmatprep.subr.mxu0 0.0
      %1731 = vmatpush2.msra.mxu0 0.0
      %1732 = vmatprep.subr.mxu0 0.0
      %1733 = vmatpush2.msra.mxu0 0.0
      %1734 = vmatprep.subr.mxu0 0.0
      %1735 = vmatpush2.msra.mxu0 0.0
      %1736 = vmatprep.subr.mxu0 0.0
      %1737 = vmatpush2.msra.mxu0 0.0
      %1738 = vmatprep.mubr.f32.mxu0 0.0
      %1739 = vmatmul.mubr.f32.gmra.mxu0 %v1596
      %v1740 = vpop.f32.mrf.mxu0
      %v1741 = vadd.f32 0.0, %v1740
      %v1742 = vpop.f32.mrf.mxu0
      %1743 = vmatprep.mubr.f32.mxu0 0.0
      %1744 = vmatmul.mubr.f32.gmra.mxu0 %v1601
      %v1745 = vpop.f32.mrf.mxu0
      %v1746 = vadd.f32 0.0, %v1745
      %v1747 = vpop.f32.mrf.mxu0
      %1748 = vmatprep.mubr.f32.mxu0 0.0
      %1749 = vmatmul.mubr.f32.gmra.mxu0 %v1606
      %v1750 = vpop.f32.mrf.mxu0
      %v1751 = vadd.f32 0.0, %v1750
      %v1752 = vpop.f32.mrf.mxu0
      %1753 = vmatprep.mubr.f32.mxu0 0.0
      %1754 = vmatmul.mubr.f32.gmra.mxu0 %v1611
      %v1755 = vpop.f32.mrf.mxu0
      %v1756 = vadd.f32 0.0, %v1755
      %v1757 = vpop.f32.mrf.mxu0
      %1758 = vmatprep.mubr.f32.mxu0 0.0
      %1759 = vmatmul.mubr.f32.gmra.mxu0 %v1616
      %v1760 = vpop.f32.mrf.mxu0
      %v1761 = vadd.f32 0.0, %v1760
      %v1762 = vpop.f32.mrf.mxu0
      %1763 = vmatprep.mubr.f32.mxu0 0.0
      %1764 = vmatmul.mubr.f32.gmra.mxu0 %v1621
      %v1765 = vpop.f32.mrf.mxu0
      %v1766 = vadd.f32 0.0, %v1765
      %v1767 = vpop.f32.mrf.mxu0
      %1768 = vmatprep.mubr.f32.mxu0 0.0
      %1769 = vmatmul.mubr.f32.gmra.mxu0 %v1626
      %v1770 = vpop.f32.mrf.mxu0
      %v1771 = vadd.f32 0.0, %v1770
      %v1772 = vpop.f32.mrf.mxu0
      %1773 = vmatprep.mubr.f32.mxu0 0.0
      %1774 = vmatmul.mubr.f32.gmra.mxu0 %v1631
      %v1775 = vpop.f32.mrf.mxu0
      %v1776 = vadd.f32 0.0, %v1775
      %v1777 = vpop.f32.mrf.mxu0
      %1778 = vmatprep.mubr.f32.mxu0 0.0
      %1779 = vmatmul.mubr.f32.gmra.mxu0 %v1636
      %v1780 = vpop.f32.mrf.mxu0
      %v1781 = vadd.f32 0.0, %v1780
      %v1782 = vpop.f32.mrf.mxu0
      %1783 = vmatprep.mubr.f32.mxu0 0.0
      %1784 = vmatmul.mubr.f32.gmra.mxu0 %v1641
      %v1785 = vpop.f32.mrf.mxu0
      %v1786 = vadd.f32 0.0, %v1785
      %v1787 = vpop.f32.mrf.mxu0
      %1788 = vmatprep.mubr.f32.mxu0 0.0
      %1789 = vmatmul.mubr.f32.gmra.mxu0 %v1646
      %v1790 = vpop.f32.mrf.mxu0
      %v1791 = vadd.f32 0.0, %v1790
      %v1792 = vpop.f32.mrf.mxu0
      %1793 = vmatprep.mubr.f32.mxu0 0.0
      %1794 = vmatmul.mubr.f32.gmra.mxu0 %v1651
      %v1795 = vpop.f32.mrf.mxu0
      %v1796 = vadd.f32 0.0, %v1795
      %v1797 = vpop.f32.mrf.mxu0
      %1798 = vmatprep.mubr.f32.mxu0 0.0
      %1799 = vmatmul.mubr.f32.gmra.mxu0 %v1656
      %v1800 = vpop.f32.mrf.mxu0
      %v1801 = vadd.f32 0.0, %v1800
      %v1802 = vpop.f32.mrf.mxu0
      %1803 = vmatprep.mubr.f32.mxu0 0.0
      %1804 = vmatmul.mubr.f32.gmra.mxu0 %v1661
      %v1805 = vpop.f32.mrf.mxu0
      %v1806 = vadd.f32 0.0, %v1805
      %v1807 = vpop.f32.mrf.mxu0
      %1808 = vmatprep.mubr.f32.mxu0 0.0
      %1809 = vmatmul.mubr.f32.gmra.mxu0 %v1666
      %v1810 = vpop.f32.mrf.mxu0
      %v1811 = vadd.f32 0.0, %v1810
      %v1812 = vpop.f32.mrf.mxu0
      %1813 = vmatprep.mubr.f32.mxu0 0.0
      %1814 = vmatmul.mubr.f32.gmra.mxu0 %v1671
      %v1815 = vpop.f32.mrf.mxu0
      %v1816 = vadd.f32 0.0, %v1815
      %v1817 = vpop.f32.mrf.mxu0
      %1818 = vdwg.mxu0
      %1819 = vst [vmem:[#allocation2] sm:$0xff] %v1741
      %1820 = vst [vmem:[#allocation2 + $0x8] sm:$0xff] %v1746
      %1821 = vst [vmem:[#allocation2 + $0x10] sm:$0xff] %v1751
      %1822 = vst [vmem:[#allocation2 + $0x18] sm:$0xff] %v1756
      %1823 = vst [vmem:[#allocation2 + $0x20] sm:$0xff] %v1761
      %1824 = vst [vmem:[#allocation2 + $0x28] sm:$0xff] %v1766
      %1825 = vst [vmem:[#allocation2 + $0x30] sm:$0xff] %v1771
      %1826 = vst [vmem:[#allocation2 + $0x38] sm:$0xff] %v1776
      %1827 = vst [vmem:[#allocation2 + $0x40] sm:$0xff] %v1781
      %1828 = vst [vmem:[#allocation2 + $0x48] sm:$0xff] %v1786
      %1829 = vst [vmem:[#allocation2 + $0x50] sm:$0xff] %v1791
      %1830 = vst [vmem:[#allocation2 + $0x58] sm:$0xff] %v1796
      %1831 = vst [vmem:[#allocation2 + $0x60] sm:$0xff] %v1801
      %1832 = vst [vmem:[#allocation2 + $0x68] sm:$0xff] %v1806
      %1833 = vst [vmem:[#allocation2 + $0x70] sm:$0xff] %v1811
      %1834 = vst [vmem:[#allocation2 + $0x78] sm:$0xff] %v1816
      %1835 = vst [vmem:[#allocation9] sm:$0xff] %v1741
      %1836 = vst [vmem:[#allocation9 + $0x8] sm:$0xff] %v1746
      %1837 = vst [vmem:[#allocation9 + $0x10] sm:$0xff] %v1751
      %1838 = vst [vmem:[#allocation9 + $0x18] sm:$0xff] %v1756
      %1839 = vst [vmem:[#allocation9 + $0x20] sm:$0xff] %v1761
      %1840 = vst [vmem:[#allocation9 + $0x28] sm:$0xff] %v1766
      %1841 = vst [vmem:[#allocation9 + $0x30] sm:$0xff] %v1771
      %1842 = vst [vmem:[#allocation9 + $0x38] sm:$0xff] %v1776
      %1843 = vst [vmem:[#allocation9 + $0x40] sm:$0xff] %v1781
      %1844 = vst [vmem:[#allocation9 + $0x48] sm:$0xff] %v1786
      %1845 = vst [vmem:[#allocation9 + $0x50] sm:$0xff] %v1791
      %1846 = vst [vmem:[#allocation9 + $0x58] sm:$0xff] %v1796
      %1847 = vst [vmem:[#allocation9 + $0x60] sm:$0xff] %v1801
      %1848 = vst [vmem:[#allocation9 + $0x68] sm:$0xff] %v1806
      %1849 = vst [vmem:[#allocation9 + $0x70] sm:$0xff] %v1811
      %1850 = vst [vmem:[#allocation9 + $0x78] sm:$0xff] %v1816
    $region21: #{tpu_custom_call.1} parent=1 // pred_fallthru
      _
    %v1851 = vld [vmem:[#allocation6] sm:$0xff]
    %v1852 = vld [vmem:[#allocation6 + $0x8] sm:$0xff]
    %v1853 = vld [vmem:[#allocation2] sm:$0xff]
    %v1854 = vld [vmem:[#allocation2 + $0x8] sm:$0xff]
    %v1855 = vld [vmem:[#allocation2 + $0x10] sm:$0xff]
    %v1856 = vld [vmem:[#allocation2 + $0x18] sm:$0xff]
    %v1857 = vld [vmem:[#allocation2 + $0x20] sm:$0xff]
    %v1858 = vld [vmem:[#allocation2 + $0x28] sm:$0xff]
    %v1859 = vld [vmem:[#allocation2 + $0x30] sm:$0xff]
    %v1860 = vld [vmem:[#allocation2 + $0x38] sm:$0xff]
    %v1861 = vld [vmem:[#allocation2 + $0x40] sm:$0xff]
    %v1862 = vld [vmem:[#allocation2 + $0x48] sm:$0xff]
    %v1863 = vld [vmem:[#allocation2 + $0x50] sm:$0xff]
    %v1864 = vld [vmem:[#allocation2 + $0x58] sm:$0xff]
    %v1865 = vld [vmem:[#allocation2 + $0x60] sm:$0xff]
    %v1866 = vld [vmem:[#allocation2 + $0x68] sm:$0xff]
    %v1867 = vld [vmem:[#allocation2 + $0x70] sm:$0xff]
    %v1868 = vld [vmem:[#allocation2 + $0x78] sm:$0xff]
    %1869 = vmatprep.subr.mxu0 0.0
    %1870 = vmatpush1.msra.mxu0 %v1868
    %1871 = vmatprep.subr.mxu0 0.0
    %1872 = vmatpush1.msra.mxu0 %v1867
    %1873 = vmatprep.subr.mxu0 0.0
    %1874 = vmatpush1.msra.mxu0 %v1866
    %1875 = vmatprep.subr.mxu0 0.0
    %1876 = vmatpush1.msra.mxu0 %v1865
    %1877 = vmatprep.subr.mxu0 0.0
    %1878 = vmatpush1.msra.mxu0 %v1864
    %1879 = vmatprep.subr.mxu0 0.0
    %1880 = vmatpush1.msra.mxu0 %v1863
    %1881 = vmatprep.subr.mxu0 0.0
    %1882 = vmatpush1.msra.mxu0 %v1862
    %1883 = vmatprep.subr.mxu0 0.0
    %1884 = vmatpush1.msra.mxu0 %v1861
    %1885 = vmatprep.subr.mxu0 0.0
    %1886 = vmatpush1.msra.mxu0 %v1860
    %1887 = vmatprep.subr.mxu0 0.0
    %1888 = vmatpush1.msra.mxu0 %v1859
    %1889 = vmatprep.subr.mxu0 0.0
    %1890 = vmatpush1.msra.mxu0 %v1858
    %1891 = vmatprep.subr.mxu0 0.0
    %1892 = vmatpush1.msra.mxu0 %v1857
    %1893 = vmatprep.subr.mxu0 0.0
    %1894 = vmatpush1.msra.mxu0 %v1856
    %1895 = vmatprep.subr.mxu0 0.0
    %1896 = vmatpush1.msra.mxu0 %v1855
    %1897 = vmatprep.subr.mxu0 0.0
    %1898 = vmatpush1.msra.mxu0 %v1854
    %1899 = vmatprep.subr.mxu0 0.0
    %1900 = vmatpush1.msra.mxu0 %v1853
    %1901 = vmatprep.subr.mxu0 0.0
    %1902 = vmatpush2.msra.mxu0 0.0
    %1903 = vmatprep.subr.mxu0 0.0
    %1904 = vmatpush2.msra.mxu0 0.0
    %1905 = vmatprep.subr.mxu0 0.0
    %1906 = vmatpush2.msra.mxu0 0.0
    %1907 = vmatprep.subr.mxu0 0.0
    %1908 = vmatpush2.msra.mxu0 0.0
    %1909 = vmatprep.subr.mxu0 0.0
    %1910 = vmatpush2.msra.mxu0 0.0
    %1911 = vmatprep.subr.mxu0 0.0
    %1912 = vmatpush2.msra.mxu0 0.0
    %1913 = vmatprep.subr.mxu0 0.0
    %1914 = vmatpush2.msra.mxu0 0.0
    %1915 = vmatprep.subr.mxu0 0.0
    %1916 = vmatpush2.msra.mxu0 0.0
    %1917 = vmatprep.subr.mxu0 0.0
    %1918 = vmatpush2.msra.mxu0 0.0
    %1919 = vmatprep.subr.mxu0 0.0
    %1920 = vmatpush2.msra.mxu0 0.0
    %1921 = vmatprep.subr.mxu0 0.0
    %1922 = vmatpush2.msra.mxu0 0.0
    %1923 = vmatprep.subr.mxu0 0.0
    %1924 = vmatpush2.msra.mxu0 0.0
    %1925 = vmatprep.subr.mxu0 0.0
    %1926 = vmatpush2.msra.mxu0 0.0
    %1927 = vmatprep.subr.mxu0 0.0
    %1928 = vmatpush2.msra.mxu0 0.0
    %1929 = vmatprep.subr.mxu0 0.0
    %1930 = vmatpush2.msra.mxu0 0.0
    %1931 = vmatprep.subr.mxu0 0.0
    %1932 = vmatpush2.msra.mxu0 0.0
    %1933 = vmatprep.mubr.f32.mxu0 0.0
    %1934 = vmatmul.mubr.f32.gmra.mxu0 %v1851
    %v1935 = vpop.f32.mrf.mxu0
    %v1936 = vadd.f32 0.0, %v1935
    %v1937 = vpop.f32.mrf.mxu0
    %1938 = vmatprep.mubr.f32.mxu0 0.0
    %1939 = vmatmul.mubr.f32.gmra.mxu0 %v1852
    %v1940 = vpop.f32.mrf.mxu0
    %v1941 = vadd.f32 0.0, %v1940
    %v1942 = vpop.f32.mrf.mxu0
    %1943 = vdwg.mxu0
    %1944 = vst [vmem:[#allocation8] sm:$0xff] %v1936
    %1945 = vst [vmem:[#allocation8 + $0x8] sm:$0xff] %v1941
    // Predicated region
    $region22: #{tpu_custom_call.1} parent=1 // pred_check
      _
    $region23: #{tpu_custom_call.1} parent=1 // pred_check_branch
      %1947 = sbr.rel (0) target = $region25
    $region24: #{tpu_custom_call.1} parent=1 // pred_region
      %s1949 = ssub.s32 256, 256
      %1950 = vsyncadd [#allocation5], %s1949
      %s1951 = sshll.u32 [#allocation8], 4
      %s1952 = int_to_ptr.vmem [resolvable:$true] %s1951
      %1957 = dma.vmem_to_hbm [thread:$0]  %s1952, 256, %s2, [#allocation5], 128, 128, 8
    $region25: #{tpu_custom_call.1} parent=1 // pred_fallthru
      _
    // Predicated region
    $region26: #{tpu_custom_call.1} parent=1 // pred_check
      _
    $region27: #{tpu_custom_call.1} parent=1 // pred_check_branch
      %1959 = sbr.rel (0) target = $region29
    $region28: #{tpu_custom_call.1} parent=1 // pred_region
      %s1961 = ssub.s32 2048, 2048
      %1962 = vsyncadd [#allocation10], %s1961
      %s1963 = sshll.u32 [#allocation9], 4
      %s1964 = int_to_ptr.vmem [resolvable:$true] %s1963
      %1969 = dma.vmem_to_hbm [thread:$0]  %s1964, 2048, %s3, [#allocation10], 128, 128, 8
    $region29: #{tpu_custom_call.1} parent=1 // pred_fallthru
      _
    // Predicated region
    $region30: #{tpu_custom_call.1} parent=1 // pred_check
      _
    $region31: #{tpu_custom_call.1} parent=1 // pred_check_branch
      %1971 = sbr.rel (0) target = $region33
    $region32: #{tpu_custom_call.1} parent=1 // pred_region
      %1972 = dma.done [#allocation5], 256
    $region33: #{tpu_custom_call.1} parent=1 // pred_fallthru
      _
    // Predicated region
    $region34: #{tpu_custom_call.1} parent=1 // pred_check
      _
    $region35: #{tpu_custom_call.1} parent=1 // pred_check_branch
      %1974 = sbr.rel (0) target = $region37
    $region36: #{tpu_custom_call.1} parent=1 // pred_region
      %1975 = dma.done [#allocation10], 2048
    $region37: #{tpu_custom_call.1} parent=1 // pred_fallthru
      _
    %1976 = vsyncpa [#allocation4], 1
    %1977 = vsyncpa [#allocation7], 1
    %1978 = vsyncpa [#allocation5], 1
    %1979 = vsyncpa [#allocation10], 1

</llo_original>
